<compile_context>
chip_gen: v7x
topology: tpu7x:2x2x1
jax: 0.10.0
libtpu: 0.0.40
codegen_flags: <defaults>
</compile_context>

<pallas_src>
import math
import functools

import jax
import jax.numpy as jnp
from jax import lax
from jax.experimental import pallas as pl
from jax.experimental.pallas import tpu as pltpu


IN_FEATURES = 10
OUT_FEATURES = 64
_INV_SQRT2 = 1.0 / math.sqrt(2.0)


def _adapter_kernel(x_ref, w_cat_ref, b_cat_ref, w_up_ref, b_up_ref, o_ref,
                    *, f_out, approximate_gelu, use_bf16):
    """Fused frozen-Linear -> downscale -> GELU -> upscale -> residual.

    Native (batch-major) layout:
      x_ref:     (TB, F_in)          input activation tile
      w_cat_ref: (F_out+F_in, F_in)  rows = [W_down@W_mod ; W_mod]   (torch (out,in) layout)
      b_cat_ref: (1, F_out+F_in)     [W_down@b_mod + b_down ; b_mod]
      w_up_ref:  (F_in, F_out)       upscale weight, torch layout
      b_up_ref:  (1, F_in)
      o_ref:     (TB, F_in)          output tile
    """
    cdt = jnp.bfloat16 if use_bf16 else jnp.float32
    x = x_ref[...].astype(cdt)

    # Single MXU pass: [h_pre | y] = x @ W_cat^T  (+ biases), f32 accumulation.
    yh = lax.dot_general(
        x, w_cat_ref[...].astype(cdt),
        dimension_numbers=(((1,), (1,)), ((), ())),
        preferred_element_type=jnp.float32,
    ) + b_cat_ref[...]
    h = yh[:, :f_out]      # (TB, F_out) pre-GELU downscale activation
    y = yh[:, f_out:]      # (TB, F_in)  frozen-module output (residual branch)

    if approximate_gelu:
        # tanh-approx GELU -> transcendental goes to the EUP slot (numerics ~1e-3
        # off nn.GELU(approximate='none')); opt-in only.
        c = math.sqrt(2.0 / math.pi)
        h = 0.5 * h * (1.0 + jnp.tanh(c * (h + 0.044715 * h * h * h)))
    else:
        # Exact erf GELU (matches nn.GELU() default).
        h = 0.5 * h * (1.0 + lax.erf(h * _INV_SQRT2))

    # out = upscale(h) + b_up ; residual add with y.
    out = lax.dot_general(
        h.astype(cdt), w_up_ref[...].astype(cdt),
        dimension_numbers=(((1,), (1,)), ((), ())),
        preferred_element_type=jnp.float32,
    )
    o_ref[...] = (y + out + b_up_ref[...]).astype(o_ref.dtype)


def _round_up(x, m):
    return (x + m - 1) // m * m


_NUM_TC_CACHE = None


def _num_tensorcores():
    """2 for chips whose 'parallel' grid axis is shared by two TensorCores."""
    global _NUM_TC_CACHE
    if _NUM_TC_CACHE is None:
        cores = 1
        try:
            kind = jax.devices()[0].device_kind.lower()
            if any(tag in kind for tag in ("v4", "v5p", "v7")):
                cores = 2
        except Exception:
            pass
        _NUM_TC_CACHE = cores
    return _NUM_TC_CACHE


def _pick_tile_b(batch, *, max_tile=4096, num_cores=1):
    """Batch tile: single full block on 1-TC chips; even step count on 2-TC chips."""
    if batch <= 0:
        return 8
    full = _round_up(batch, 8)
    if full <= max_tile and num_cores <= 1:
        return batch                      # one block == full array (no masking)
    tile = min(full, max_tile)
    if num_cores > 1:
        steps = -(-batch // tile)
        if steps % num_cores:
            steps += num_cores - steps % num_cores
            tile = _round_up(-(-batch // steps), 8)
    return max(8, tile)


@functools.partial(jax.jit, static_argnames=("tile_b", "approximate_gelu", "use_bf16"))
def adapter_forward(x, w_mod, b_mod, w_down, b_down, w_up, b_up, *,
                    tile_b=None, approximate_gelu=False, use_bf16=False):
    """x: (B, F_in).  All weights in PyTorch nn.Linear layout (out_features, in_features).

    Returns (B, F_in) = y + upscale(GELU(downscale(y))), with y = frozen module(x).
    """
    B, f_in = x.shape
    f_out = w_down.shape[0]
    f_cat = f_out + f_in

    if B == 0:
        return jnp.zeros((0, f_in), x.dtype)

    if tile_b is None:
        tile_b = _pick_tile_b(B, num_cores=_num_tensorcores())
    else:
        tile_b = int(tile_b)
    if tile_b >= B:
        tile_b = B                            # block dims == array dims
    elif tile_b % 8:
        tile_b = max(8, (tile_b // 8) * 8)    # sublane-aligned tile

    # Pre-compose the frozen module with the downscale (wrapper-side, tiny):
    #   h_pre = x @ (W_down @ W_mod)^T + (W_down @ b_mod + b_down)
    # and stack with W_mod so one MXU pass produces both h_pre and y.
    w_dm = w_down @ w_mod                                     # (f_out, f_in)
    b_dm = w_down @ b_mod + b_down                            # (f_out,)
    w_cat = jnp.concatenate([w_dm, w_mod], axis=0)            # (f_cat, f_in)
    b_cat = jnp.concatenate([b_dm, b_mod]).reshape(1, f_cat)  # (1, f_cat)
    b_up_r = b_up.reshape(1, f_in)

    grid = (pl.cdiv(B, tile_b),)
    kernel = functools.partial(_adapter_kernel, f_out=f_out,
                               approximate_gelu=approximate_gelu, use_bf16=use_bf16)
    return pl.pallas_call(
        kernel,
        out_shape=jax.ShapeDtypeStruct((B, f_in), x.dtype),
        grid_spec=pl.GridSpec(
            grid=grid,
            in_specs=[
                pl.BlockSpec((tile_b, f_in), lambda i: (i, 0)),   # x tile (native layout)
                pl.BlockSpec((f_cat, f_in), lambda i: (0, 0)),    # [W_dm; W_mod] (resident)
                pl.BlockSpec((1, f_cat), lambda i: (0, 0)),       # [b_dm; b_mod]
                pl.BlockSpec((f_in, f_out), lambda i: (0, 0)),    # W_up (resident)
                pl.BlockSpec((1, f_in), lambda i: (0, 0)),        # b_up
            ],
            out_specs=pl.BlockSpec((tile_b, f_in), lambda i: (i, 0)),
        ),
        compiler_params=pltpu.CompilerParams(
            dimension_semantics=("parallel",),
            vmem_limit_bytes=48 * 1024 * 1024,   # above v5e's 16 MiB default, below v7x physical
        ),
    )(x, w_cat, b_cat, w_up, b_up_r)


def _reference(x, w_mod, b_mod, w_down, b_down, w_up, b_up):
    """Pure-JAX reference mirroring the PyTorch module (torch nn.Linear layout)."""
    y = lax.stop_gradient(x @ w_mod.T + b_mod)          # frozen module under no_grad
    h = y @ w_down.T + b_down
    h = 0.5 * h * (1.0 + lax.erf(h * _INV_SQRT2))
    return y + (h @ w_up.T + b_up)


# TODO(synk): only a Linear(in, in) wrapped `module` is fused into the kernel; an
# arbitrary wrapped nn.Module would have to run in plain JAX before adapter_forward.

if __name__ == "__main__":
    key = jax.random.PRNGKey(0)
    ks = jax.random.split(key, 7)

    B = 500  # not a multiple of the tile -> exercises the ragged last block path
    x = jax.random.normal(ks[0], (B, IN_FEATURES), dtype=jnp.float32)

    # Parameters in PyTorch nn.Linear layout (out_features, in_features).
    w_mod = jax.random.normal(ks[1], (IN_FEATURES, IN_FEATURES), jnp.float32) * 0.1
    b_mod = jax.random.normal(ks[2], (IN_FEATURES,), jnp.float32) * 0.1
    w_down = jax.random.normal(ks[3], (OUT_FEATURES, IN_FEATURES), jnp.float32) * 0.1
    b_down = jax.random.normal(ks[4], (OUT_FEATURES,), jnp.float32) * 0.1
    w_up = jax.random.normal(ks[5], (IN_FEATURES, OUT_FEATURES), jnp.float32) * 0.1
    b_up = jax.random.normal(ks[6], (IN_FEATURES,), jnp.float32) * 0.1

    out = adapter_forward(x, w_mod, b_mod, w_down, b_down, w_up, b_up)
    out = jax.block_until_ready(out)

    ref = _reference(x, w_mod, b_mod, w_down, b_down, w_up, b_up)
    assert out.shape == (B, IN_FEATURES)
    # The W_down@W_mod pre-composition changes f32 rounding at the ~1e-7 level.
    assert jnp.allclose(out, ref, atol=1e-5, rtol=1e-4), "mismatch vs reference"

    print("KERNEL_OK")
</pallas_src>

<mosaic_0001>
module attributes {stable_mosaic.version = 11 : i64} {
  func.func @_adapter_kernel(%arg0: i32, %arg1: memref<500x10xf32, #tpu.memory_space<vmem>>, %arg2: memref<74x10xf32, #tpu.memory_space<vmem>>, %arg3: memref<1x74xf32, #tpu.memory_space<vmem>>, %arg4: memref<10x64xf32, #tpu.memory_space<vmem>>, %arg5: memref<1x10xf32, #tpu.memory_space<vmem>>, %arg6: memref<500x10xf32, #tpu.memory_space<vmem>>) attributes {dimension_semantics = [#tpu.dimension_semantics<parallel>], iteration_bounds = array<i64: 1>, scalar_prefetch = 0 : i64, scratch_operands = 0 : i64, tpu.core_type = #tpu.core_type<tc>, window_params = [{transform_indices = @transform_0, window_bounds = array<i64: 500, 10>}, {pipeline_mode = #tpu.pipeline_mode<synchronous>, transform_indices = @transform_1, window_bounds = array<i64: 74, 10>}, {pipeline_mode = #tpu.pipeline_mode<synchronous>, transform_indices = @transform_2, window_bounds = array<i64: 1, 74>}, {pipeline_mode = #tpu.pipeline_mode<synchronous>, transform_indices = @transform_3, window_bounds = array<i64: 10, 64>}, {pipeline_mode = #tpu.pipeline_mode<synchronous>, transform_indices = @transform_4, window_bounds = array<i64: 1, 10>}, {transform_indices = @transform_5, window_bounds = array<i64: 500, 10>}]} {
    %c0 = arith.constant 0 : index
    %c0_0 = arith.constant 0 : index
    %0 = vector.load %arg1[%c0, %c0_0] : memref<500x10xf32, #tpu.memory_space<vmem>>, vector<500x10xf32>
    %c0_1 = arith.constant 0 : index
    %c0_2 = arith.constant 0 : index
    %1 = vector.load %arg2[%c0_1, %c0_2] : memref<74x10xf32, #tpu.memory_space<vmem>>, vector<74x10xf32>
    %cst = arith.constant dense<0.000000e+00> : vector<500x74xf32>
    %2 = tpu.matmul %0, %1, %cst {dimension_numbers = #tpu.dot_dimension_numbers<[1], [1], [0], [0], [0, 0, 1, 0], [], []>} : vector<500x10xf32>, vector<74x10xf32>, vector<500x74xf32> -> vector<500x74xf32>
    %c0_3 = arith.constant 0 : index
    %c0_4 = arith.constant 0 : index
    %3 = vector.load %arg3[%c0_3, %c0_4] : memref<1x74xf32, #tpu.memory_space<vmem>>, vector<1x74xf32>
    %4 = vector.broadcast %3 : vector<1x74xf32> to vector<500x74xf32>
    %5 = arith.addf %2, %4 : vector<500x74xf32>
    %6 = vector.extract_strided_slice %5 {offsets = [0, 0], sizes = [500, 64], strides = [1, 1]} : vector<500x74xf32> to vector<500x64xf32>
    %7 = vector.extract_strided_slice %5 {offsets = [0, 64], sizes = [500, 10], strides = [1, 1]} : vector<500x74xf32> to vector<500x10xf32>
    %cst_5 = arith.constant 5.000000e-01 : f32
    %8 = vector.broadcast %cst_5 : f32 to vector<500x64xf32>
    %9 = arith.mulf %8, %6 : vector<500x64xf32>
    %cst_6 = arith.constant 0.707106769 : f32
    %10 = vector.broadcast %cst_6 : f32 to vector<500x64xf32>
    %11 = arith.mulf %6, %10 : vector<500x64xf32>
    %12 = math.erf %11 : vector<500x64xf32>
    %cst_7 = arith.constant 1.000000e+00 : f32
    %13 = vector.broadcast %cst_7 : f32 to vector<500x64xf32>
    %14 = arith.addf %13, %12 : vector<500x64xf32>
    %15 = arith.mulf %9, %14 : vector<500x64xf32>
    %c0_8 = arith.constant 0 : index
    %c0_9 = arith.constant 0 : index
    %16 = vector.load %arg4[%c0_8, %c0_9] : memref<10x64xf32, #tpu.memory_space<vmem>>, vector<10x64xf32>
    %cst_10 = arith.constant dense<0.000000e+00> : vector<500x10xf32>
    %17 = tpu.matmul %15, %16, %cst_10 {dimension_numbers = #tpu.dot_dimension_numbers<[1], [1], [0], [0], [0, 0, 1, 0], [], []>} : vector<500x64xf32>, vector<10x64xf32>, vector<500x10xf32> -> vector<500x10xf32>
    %18 = arith.addf %7, %17 : vector<500x10xf32>
    %c0_11 = arith.constant 0 : index
    %c0_12 = arith.constant 0 : index
    %19 = vector.load %arg5[%c0_11, %c0_12] : memref<1x10xf32, #tpu.memory_space<vmem>>, vector<1x10xf32>
    %20 = vector.broadcast %19 : vector<1x10xf32> to vector<500x10xf32>
    %21 = arith.addf %18, %20 : vector<500x10xf32>
    %c0_13 = arith.constant 0 : index
    %c0_14 = arith.constant 0 : index
    %22 = vector.load %arg6[%c0_13, %c0_14] : memref<500x10xf32, #tpu.memory_space<vmem>>, vector<500x10xf32>
    tpu.vector_store %arg6[%c0_13, %c0_14], %21 {strides = array<i32>} : memref<500x10xf32, #tpu.memory_space<vmem>>, vector<500x10xf32>,
    return
  }
  func.func @transform_0(%arg0: i32) -> (i32, i32) {
    %c0_i32 = arith.constant 0 : i32
    %c0_i32_0 = arith.constant 0 : i32
    return %arg0, %c0_i32 : i32, i32
  }
  func.func @transform_1(%arg0: i32) -> (i32, i32) {
    %c0_i32 = arith.constant 0 : i32
    %c0_i32_0 = arith.constant 0 : i32
    %c0_i32_1 = arith.constant 0 : i32
    return %c0_i32, %c0_i32_0 : i32, i32
  }
  func.func @transform_2(%arg0: i32) -> (i32, i32) {
    %c0_i32 = arith.constant 0 : i32
    %c0_i32_0 = arith.constant 0 : i32
    %c0_i32_1 = arith.constant 0 : i32
    return %c0_i32, %c0_i32_0 : i32, i32
  }
  func.func @transform_3(%arg0: i32) -> (i32, i32) {
    %c0_i32 = arith.constant 0 : i32
    %c0_i32_0 = arith.constant 0 : i32
    %c0_i32_1 = arith.constant 0 : i32
    return %c0_i32, %c0_i32_0 : i32, i32
  }
  func.func @transform_4(%arg0: i32) -> (i32, i32) {
    %c0_i32 = arith.constant 0 : i32
    %c0_i32_0 = arith.constant 0 : i32
    %c0_i32_1 = arith.constant 0 : i32
    return %c0_i32, %c0_i32_0 : i32, i32
  }
  func.func @transform_5(%arg0: i32) -> (i32, i32) {
    %c0_i32 = arith.constant 0 : i32
    %c0_i32_0 = arith.constant 0 : i32
    return %arg0, %c0_i32 : i32, i32
  }
}

</mosaic_0001>

<llo_original>
// kernel: adapter_forward.1
$region0: #{adapter_forward.1}
  #allocation0 [shape = 'u32[]', space=smem, size = 0x4, offset = 0x4, fixed_abs, tag = 'smem constant byte address 0x4 - core index']
  #allocation1 [shape = 'u32[144,128]{1,0:T(1,128)}', space=vmem, size = 0x12000, scoped, tag = 'internal scratch']
  %s0 = inlined_call_operand.vmem [shape: f32[500,10], index: 0, kind: input, shape index: {}]
  %s1 = inlined_call_operand.vmem [shape: f32[74,10], index: 1, kind: input, shape index: {}]
  %s2 = inlined_call_operand.vmem [shape: f32[1,74], index: 2, kind: input, shape index: {}]
  %s3 = inlined_call_operand.vmem [shape: f32[10,64], index: 3, kind: input, shape index: {}]
  %s4 = inlined_call_operand.vmem [shape: f32[1,10], index: 4, kind: input, shape index: {}]
  %s5 = inlined_call_operand.vmem [shape: f32[500,10], index: 5, kind: output, shape index: {}]
  %s6 = sld [smem:[#allocation0]]
  $region30: #{adapter_forward.1} parent=0
    _
  %s8 = ssub.s32 1, %s6
  %s9 = scalar_select 0, %s8, %s6
  // Predicated region
  $region2: #{adapter_forward.1} parent=0 // pred_check
    _
  $region3: #{adapter_forward.1} parent=0 // pred_check_branch
    %11 = sbr.rel (0) target = $region5
  $region4: #{adapter_forward.1} parent=0 // pred_region
    _
  $region5: #{adapter_forward.1} parent=0 // pred_fallthru
    _
  // Predicated region
  $region6: #{adapter_forward.1} parent=0 // pred_check
    _
  $region7: #{adapter_forward.1} parent=0 // pred_check_branch
    %13 = sbr.rel (0) target = $region9
  $region8: #{adapter_forward.1} parent=0 // pred_region
    _
  $region9: #{adapter_forward.1} parent=0 // pred_fallthru
    _
  // Predicated region
  $region10: #{adapter_forward.1} parent=0 // pred_check
    _
  $region11: #{adapter_forward.1} parent=0 // pred_check_branch
    %15 = sbr.rel (0) target = $region13
  $region12: #{adapter_forward.1} parent=0 // pred_region
    _
  $region13: #{adapter_forward.1} parent=0 // pred_fallthru
    _
  // Predicated region
  $region14: #{adapter_forward.1} parent=0 // pred_check
    _
  $region15: #{adapter_forward.1} parent=0 // pred_check_branch
    %17 = sbr.rel (0) target = $region17
  $region16: #{adapter_forward.1} parent=0 // pred_region
    _
  $region17: #{adapter_forward.1} parent=0 // pred_fallthru
    _
  // Predicated region
  $region18: #{adapter_forward.1} parent=0 // pred_check
    _
  $region19: #{adapter_forward.1} parent=0 // pred_check_branch
    %19 = sbr.rel (0) target = $region21
  $region20: #{adapter_forward.1} parent=0 // pred_region
    _
  $region21: #{adapter_forward.1} parent=0 // pred_fallthru
    _
  %v20 = vld [vmem:[%s0] sm:$0xff]
  %v21 = vld [vmem:[%s0 + $0x8] sm:$0xff]
  %v22 = vld [vmem:[%s0 + $0x10] sm:$0xff]
  %v23 = vld [vmem:[%s0 + $0x18] sm:$0xff]
  %v24 = vld [vmem:[%s0 + $0x20] sm:$0xff]
  %v25 = vld [vmem:[%s0 + $0x28] sm:$0xff]
  %v26 = vld [vmem:[%s0 + $0x30] sm:$0xff]
  %v27 = vld [vmem:[%s0 + $0x38] sm:$0xff]
  %v28 = vld [vmem:[%s0 + $0x40] sm:$0xff]
  %v29 = vld [vmem:[%s0 + $0x48] sm:$0xff]
  %v30 = vld [vmem:[%s0 + $0x50] sm:$0xff]
  %v31 = vld [vmem:[%s0 + $0x58] sm:$0xff]
  %v32 = vld [vmem:[%s0 + $0x60] sm:$0xff]
  %v33 = vld [vmem:[%s0 + $0x68] sm:$0xff]
  %v34 = vld [vmem:[%s0 + $0x70] sm:$0xff]
  %v35 = vld [vmem:[%s0 + $0x78] sm:$0xff]
  %v36 = vld [vmem:[%s0 + $0x80] sm:$0xff]
  %v37 = vld [vmem:[%s0 + $0x88] sm:$0xff]
  %v38 = vld [vmem:[%s0 + $0x90] sm:$0xff]
  %v39 = vld [vmem:[%s0 + $0x98] sm:$0xff]
  %v40 = vld [vmem:[%s0 + $0xa0] sm:$0xff]
  %v41 = vld [vmem:[%s0 + $0xa8] sm:$0xff]
  %v42 = vld [vmem:[%s0 + $0xb0] sm:$0xff]
  %v43 = vld [vmem:[%s0 + $0xb8] sm:$0xff]
  %v44 = vld [vmem:[%s0 + $0xc0] sm:$0xff]
  %v45 = vld [vmem:[%s0 + $0xc8] sm:$0xff]
  %v46 = vld [vmem:[%s0 + $0xd0] sm:$0xff]
  %v47 = vld [vmem:[%s0 + $0xd8] sm:$0xff]
  %v48 = vld [vmem:[%s0 + $0xe0] sm:$0xff]
  %v49 = vld [vmem:[%s0 + $0xe8] sm:$0xff]
  %v50 = vld [vmem:[%s0 + $0xf0] sm:$0xff]
  %v51 = vld [vmem:[%s0 + $0xf8] sm:$0xff]
  %v52 = vld [vmem:[%s0 + $0x100] sm:$0xff]
  %v53 = vld [vmem:[%s0 + $0x108] sm:$0xff]
  %v54 = vld [vmem:[%s0 + $0x110] sm:$0xff]
  %v55 = vld [vmem:[%s0 + $0x118] sm:$0xff]
  %v56 = vld [vmem:[%s0 + $0x120] sm:$0xff]
  %v57 = vld [vmem:[%s0 + $0x128] sm:$0xff]
  %v58 = vld [vmem:[%s0 + $0x130] sm:$0xff]
  %v59 = vld [vmem:[%s0 + $0x138] sm:$0xff]
  %v60 = vld [vmem:[%s0 + $0x140] sm:$0xff]
  %v61 = vld [vmem:[%s0 + $0x148] sm:$0xff]
  %v62 = vld [vmem:[%s0 + $0x150] sm:$0xff]
  %v63 = vld [vmem:[%s0 + $0x158] sm:$0xff]
  %v64 = vld [vmem:[%s0 + $0x160] sm:$0xff]
  %v65 = vld [vmem:[%s0 + $0x168] sm:$0xff]
  %v66 = vld [vmem:[%s0 + $0x170] sm:$0xff]
  %v67 = vld [vmem:[%s0 + $0x178] sm:$0xff]
  %v68 = vld [vmem:[%s0 + $0x180] sm:$0xff]
  %v69 = vld [vmem:[%s0 + $0x188] sm:$0xff]
  %v70 = vld [vmem:[%s0 + $0x190] sm:$0xff]
  %v71 = vld [vmem:[%s0 + $0x198] sm:$0xff]
  %v72 = vld [vmem:[%s0 + $0x1a0] sm:$0xff]
  %v73 = vld [vmem:[%s0 + $0x1a8] sm:$0xff]
  %v74 = vld [vmem:[%s0 + $0x1b0] sm:$0xff]
  %v75 = vld [vmem:[%s0 + $0x1b8] sm:$0xff]
  %v76 = vld [vmem:[%s0 + $0x1c0] sm:$0xff]
  %v77 = vld [vmem:[%s0 + $0x1c8] sm:$0xff]
  %v78 = vld [vmem:[%s0 + $0x1d0] sm:$0xff]
  %v79 = vld [vmem:[%s0 + $0x1d8] sm:$0xff]
  %v80 = vld [vmem:[%s0 + $0x1e0] sm:$0xff]
  %v81 = vld [vmem:[%s0 + $0x1e8] sm:$0xff]
  %v82 = vld [vmem:[%s0 + $0x1f0] sm:$0xf]
  %v83 = vld [vmem:[%s1] sm:$0xff]
  %v84 = vld [vmem:[%s1 + $0x8] sm:$0xff]
  %v85 = vld [vmem:[%s1 + $0x10] sm:$0xff]
  %v86 = vld [vmem:[%s1 + $0x18] sm:$0xff]
  %v87 = vld [vmem:[%s1 + $0x20] sm:$0xff]
  %v88 = vld [vmem:[%s1 + $0x28] sm:$0xff]
  %v89 = vld [vmem:[%s1 + $0x30] sm:$0xff]
  %v90 = vld [vmem:[%s1 + $0x38] sm:$0xff]
  %v91 = vld [vmem:[%s1 + $0x40] sm:$0xff]
  %v92 = vld [vmem:[%s1 + $0x48] sm:$0x3]
  %v93 = vld [vmem:[%s2] sm:$0x1]
  %v95 = vlaneseq
  %v96 = vshrl.u32 %v95, 7
  %v97 = vsub.s32 0, %v96
  %v98 = vrot.slane %v93, %v97
  %vm100 = vcmask 80896
  %v102 = vsel %vm100, %v20, 0
  %v105 = vsel %vm100, %v21, 0
  %v108 = vsel %vm100, %v22, 0
  %v111 = vsel %vm100, %v23, 0
  %v114 = vsel %vm100, %v24, 0
  %v117 = vsel %vm100, %v25, 0
  %v120 = vsel %vm100, %v26, 0
  %v123 = vsel %vm100, %v27, 0
  %v126 = vsel %vm100, %v28, 0
  %v129 = vsel %vm100, %v29, 0
  %v132 = vsel %vm100, %v30, 0
  %v135 = vsel %vm100, %v31, 0
  %v138 = vsel %vm100, %v32, 0
  %v141 = vsel %vm100, %v33, 0
  %v144 = vsel %vm100, %v34, 0
  %v147 = vsel %vm100, %v35, 0
  %v150 = vsel %vm100, %v36, 0
  %v153 = vsel %vm100, %v37, 0
  %v156 = vsel %vm100, %v38, 0
  %v159 = vsel %vm100, %v39, 0
  %v162 = vsel %vm100, %v40, 0
  %v165 = vsel %vm100, %v41, 0
  %v168 = vsel %vm100, %v42, 0
  %v171 = vsel %vm100, %v43, 0
  %v174 = vsel %vm100, %v44, 0
  %v177 = vsel %vm100, %v45, 0
  %v180 = vsel %vm100, %v46, 0
  %v183 = vsel %vm100, %v47, 0
  %v186 = vsel %vm100, %v48, 0
  %v189 = vsel %vm100, %v49, 0
  %v192 = vsel %vm100, %v50, 0
  %v195 = vsel %vm100, %v51, 0
  %v198 = vsel %vm100, %v52, 0
  %v201 = vsel %vm100, %v53, 0
  %v204 = vsel %vm100, %v54, 0
  %v207 = vsel %vm100, %v55, 0
  %v210 = vsel %vm100, %v56, 0
  %v213 = vsel %vm100, %v57, 0
  %v216 = vsel %vm100, %v58, 0
  %v219 = vsel %vm100, %v59, 0
  %v222 = vsel %vm100, %v60, 0
  %v225 = vsel %vm100, %v61, 0
  %v228 = vsel %vm100, %v62, 0
  %v231 = vsel %vm100, %v63, 0
  %v234 = vsel %vm100, %v64, 0
  %v237 = vsel %vm100, %v65, 0
  %v240 = vsel %vm100, %v66, 0
  %v243 = vsel %vm100, %v67, 0
  %v246 = vsel %vm100, %v68, 0
  %v249 = vsel %vm100, %v69, 0
  %v252 = vsel %vm100, %v70, 0
  %v255 = vsel %vm100, %v71, 0
  %v258 = vsel %vm100, %v72, 0
  %v261 = vsel %vm100, %v73, 0
  %v264 = vsel %vm100, %v74, 0
  %v267 = vsel %vm100, %v75, 0
  %v270 = vsel %vm100, %v76, 0
  %v273 = vsel %vm100, %v77, 0
  %v276 = vsel %vm100, %v78, 0
  %v279 = vsel %vm100, %v79, 0
  %v282 = vsel %vm100, %v80, 0
  %v285 = vsel %vm100, %v81, 0
  %v288 = vsel %vm100, %v82, 0
  %v291 = vsel %vm100, %v83, 0
  %v294 = vsel %vm100, %v84, 0
  %v297 = vsel %vm100, %v85, 0
  %v300 = vsel %vm100, %v86, 0
  %v303 = vsel %vm100, %v87, 0
  %v306 = vsel %vm100, %v88, 0
  %v309 = vsel %vm100, %v89, 0
  %v312 = vsel %vm100, %v90, 0
  %v315 = vsel %vm100, %v91, 0
  %v318 = vsel %vm100, %v92, 0
  %320 = vmatprep.subr.mxu0 0.0
  %321 = vmatpush1.xpose.msra.mxu0 %v291
  %322 = vmatprep.subr.mxu0 0.0
  %323 = vmatpush1.xpose.msra.mxu0 %v294
  %324 = vmatprep.subr.mxu0 0.0
  %325 = vmatpush1.xpose.msra.mxu0 %v297
  %326 = vmatprep.subr.mxu0 0.0
  %327 = vmatpush1.xpose.msra.mxu0 %v300
  %328 = vmatprep.subr.mxu0 0.0
  %329 = vmatpush1.xpose.msra.mxu0 %v303
  %330 = vmatprep.subr.mxu0 0.0
  %331 = vmatpush1.xpose.msra.mxu0 %v306
  %332 = vmatprep.subr.mxu0 0.0
  %333 = vmatpush1.xpose.msra.mxu0 %v309
  %334 = vmatprep.subr.mxu0 0.0
  %335 = vmatpush1.xpose.msra.mxu0 %v312
  %336 = vmatprep.subr.mxu0 0.0
  %337 = vmatpush1.xpose.msra.mxu0 %v315
  %338 = vmatprep.subr.mxu0 0.0
  %339 = vmatpush1.xpose.msra.mxu0 %v318
  %340 = vmatprep.subr.mxu0 0.0
  %341 = vmatpush1.xpose.msra.mxu0 0.0
  %342 = vmatprep.subr.mxu0 0.0
  %343 = vmatpush1.xpose.msra.mxu0 0.0
  %344 = vmatprep.subr.mxu0 0.0
  %345 = vmatpush1.xpose.msra.mxu0 0.0
  %346 = vmatprep.subr.mxu0 0.0
  %347 = vmatpush1.xpose.msra.mxu0 0.0
  %348 = vmatprep.subr.mxu0 0.0
  %349 = vmatpush1.xpose.msra.mxu0 0.0
  %350 = vmatprep.subr.mxu0 0.0
  %351 = vmatpush1.xpose.msra.mxu0 0.0
  %352 = vmatprep.subr.mxu0 0.0
  %353 = vmatpush1.xpose.msra.mxu0 0.0
  %354 = vmatprep.subr.mxu0 0.0
  %355 = vmatpush1.xpose.msra.mxu0 0.0
  %356 = vmatprep.subr.mxu0 0.0
  %357 = vmatpush1.xpose.msra.mxu0 0.0
  %358 = vmatprep.subr.mxu0 0.0
  %359 = vmatpush1.xpose.msra.mxu0 0.0
  %360 = vmatprep.subr.mxu0 0.0
  %361 = vmatpush1.xpose.msra.mxu0 0.0
  %362 = vmatprep.subr.mxu0 0.0
  %363 = vmatpush1.xpose.msra.mxu0 0.0
  %364 = vmatprep.subr.mxu0 0.0
  %365 = vmatpush1.xpose.msra.mxu0 0.0
  %366 = vmatprep.subr.mxu0 0.0
  %367 = vmatpush1.xpose.msra.mxu0 0.0
  %368 = vmatprep.subr.mxu0 0.0
  %369 = vmatpush1.xpose.msra.mxu0 0.0
  %370 = vmatprep.subr.mxu0 0.0
  %371 = vmatpush1.xpose.msra.mxu0 0.0
  %372 = vmatprep.subr.mxu0 0.0
  %373 = vmatpush1.xpose.msra.mxu0 0.0
  %374 = vmatprep.subr.mxu0 0.0
  %375 = vmatpush1.xpose.msra.mxu0 0.0
  %376 = vmatprep.subr.mxu0 0.0
  %377 = vmatpush1.xpose.msra.mxu0 0.0
  %378 = vmatprep.subr.mxu0 0.0
  %379 = vmatpush1.xpose.msra.mxu0 0.0
  %380 = vmatprep.subr.mxu0 0.0
  %381 = vmatpush1.xpose.msra.mxu0 0.0
  %382 = vmatprep.subr.mxu0 0.0
  %383 = vmatpush1.xpose.msra.mxu0 0.0
  %384 = vmatprep.mubr.f32.mxu0 0.0
  %385 = vmatmul.mubr.f32.gmra.mrb[0].mxu0 %v102
  %v386 = vpop.f32.mrb[0].mxu0
  %v387 = vadd.f32 %v98, %v386
  %v388 = vpop.f32.mrb[0].mxu0
  %389 = vmatprep.mubr.f32.mxu0 0.0
  %390 = vmatmul.mubr.f32.gmra.mrb[0].mxu0 %v105
  %v391 = vpop.f32.mrb[0].mxu0
  %v392 = vadd.f32 %v98, %v391
  %v393 = vpop.f32.mrb[0].mxu0
  %394 = vmatprep.mubr.f32.mxu0 0.0
  %395 = vmatmul.mubr.f32.gmra.mrb[0].mxu0 %v108
  %v396 = vpop.f32.mrb[0].mxu0
  %v397 = vadd.f32 %v98, %v396
  %v398 = vpop.f32.mrb[0].mxu0
  %399 = vmatprep.mubr.f32.mxu0 0.0
  %400 = vmatmul.mubr.f32.gmra.mrb[0].mxu0 %v111
  %v401 = vpop.f32.mrb[0].mxu0
  %v402 = vadd.f32 %v98, %v401
  %v403 = vpop.f32.mrb[0].mxu0
  %404 = vmatprep.mubr.f32.mxu0 0.0
  %405 = vmatmul.mubr.f32.gmra.mrb[0].mxu0 %v114
  %v406 = vpop.f32.mrb[0].mxu0
  %v407 = vadd.f32 %v98, %v406
  %v408 = vpop.f32.mrb[0].mxu0
  %409 = vmatprep.mubr.f32.mxu0 0.0
  %410 = vmatmul.mubr.f32.gmra.mrb[0].mxu0 %v117
  %v411 = vpop.f32.mrb[0].mxu0
  %v412 = vadd.f32 %v98, %v411
  %v413 = vpop.f32.mrb[0].mxu0
  %414 = vmatprep.mubr.f32.mxu0 0.0
  %415 = vmatmul.mubr.f32.gmra.mrb[0].mxu0 %v120
  %v416 = vpop.f32.mrb[0].mxu0
  %v417 = vadd.f32 %v98, %v416
  %v418 = vpop.f32.mrb[0].mxu0
  %419 = vmatprep.mubr.f32.mxu0 0.0
  %420 = vmatmul.mubr.f32.gmra.mrb[0].mxu0 %v123
  %v421 = vpop.f32.mrb[0].mxu0
  %v422 = vadd.f32 %v98, %v421
  %v423 = vpop.f32.mrb[0].mxu0
  %424 = vmatprep.mubr.f32.mxu0 0.0
  %425 = vmatmul.mubr.f32.gmra.mrb[0].mxu0 %v126
  %v426 = vpop.f32.mrb[0].mxu0
  %v427 = vadd.f32 %v98, %v426
  %v428 = vpop.f32.mrb[0].mxu0
  %429 = vmatprep.mubr.f32.mxu0 0.0
  %430 = vmatmul.mubr.f32.gmra.mrb[0].mxu0 %v129
  %v431 = vpop.f32.mrb[0].mxu0
  %v432 = vadd.f32 %v98, %v431
  %v433 = vpop.f32.mrb[0].mxu0
  %434 = vmatprep.mubr.f32.mxu0 0.0
  %435 = vmatmul.mubr.f32.gmra.mrb[0].mxu0 %v132
  %v436 = vpop.f32.mrb[0].mxu0
  %v437 = vadd.f32 %v98, %v436
  %v438 = vpop.f32.mrb[0].mxu0
  %439 = vmatprep.mubr.f32.mxu0 0.0
  %440 = vmatmul.mubr.f32.gmra.mrb[0].mxu0 %v135
  %v441 = vpop.f32.mrb[0].mxu0
  %v442 = vadd.f32 %v98, %v441
  %v443 = vpop.f32.mrb[0].mxu0
  %444 = vmatprep.mubr.f32.mxu0 0.0
  %445 = vmatmul.mubr.f32.gmra.mrb[0].mxu0 %v138
  %v446 = vpop.f32.mrb[0].mxu0
  %v447 = vadd.f32 %v98, %v446
  %v448 = vpop.f32.mrb[0].mxu0
  %449 = vmatprep.mubr.f32.mxu0 0.0
  %450 = vmatmul.mubr.f32.gmra.mrb[0].mxu0 %v141
  %v451 = vpop.f32.mrb[0].mxu0
  %v452 = vadd.f32 %v98, %v451
  %v453 = vpop.f32.mrb[0].mxu0
  %454 = vmatprep.mubr.f32.mxu0 0.0
  %455 = vmatmul.mubr.f32.gmra.mrb[0].mxu0 %v144
  %v456 = vpop.f32.mrb[0].mxu0
  %v457 = vadd.f32 %v98, %v456
  %v458 = vpop.f32.mrb[0].mxu0
  %459 = vmatprep.mubr.f32.mxu0 0.0
  %460 = vmatmul.mubr.f32.gmra.mrb[0].mxu0 %v147
  %v461 = vpop.f32.mrb[0].mxu0
  %v462 = vadd.f32 %v98, %v461
  %v463 = vpop.f32.mrb[0].mxu0
  %464 = vmatprep.mubr.f32.mxu0 0.0
  %465 = vmatmul.mubr.f32.gmra.mrb[0].mxu0 %v150
  %v466 = vpop.f32.mrb[0].mxu0
  %v467 = vadd.f32 %v98, %v466
  %v468 = vpop.f32.mrb[0].mxu0
  %469 = vmatprep.mubr.f32.mxu0 0.0
  %470 = vmatmul.mubr.f32.gmra.mrb[0].mxu0 %v153
  %v471 = vpop.f32.mrb[0].mxu0
  %v472 = vadd.f32 %v98, %v471
  %v473 = vpop.f32.mrb[0].mxu0
  %474 = vmatprep.mubr.f32.mxu0 0.0
  %475 = vmatmul.mubr.f32.gmra.mrb[0].mxu0 %v156
  %v476 = vpop.f32.mrb[0].mxu0
  %v477 = vadd.f32 %v98, %v476
  %v478 = vpop.f32.mrb[0].mxu0
  %479 = vmatprep.mubr.f32.mxu0 0.0
  %480 = vmatmul.mubr.f32.gmra.mrb[0].mxu0 %v159
  %v481 = vpop.f32.mrb[0].mxu0
  %v482 = vadd.f32 %v98, %v481
  %v483 = vpop.f32.mrb[0].mxu0
  %484 = vmatprep.mubr.f32.mxu0 0.0
  %485 = vmatmul.mubr.f32.gmra.mrb[0].mxu0 %v162
  %v486 = vpop.f32.mrb[0].mxu0
  %v487 = vadd.f32 %v98, %v486
  %v488 = vpop.f32.mrb[0].mxu0
  %489 = vmatprep.mubr.f32.mxu0 0.0
  %490 = vmatmul.mubr.f32.gmra.mrb[0].mxu0 %v165
  %v491 = vpop.f32.mrb[0].mxu0
  %v492 = vadd.f32 %v98, %v491
  %v493 = vpop.f32.mrb[0].mxu0
  %494 = vmatprep.mubr.f32.mxu0 0.0
  %495 = vmatmul.mubr.f32.gmra.mrb[0].mxu0 %v168
  %v496 = vpop.f32.mrb[0].mxu0
  %v497 = vadd.f32 %v98, %v496
  %v498 = vpop.f32.mrb[0].mxu0
  %499 = vmatprep.mubr.f32.mxu0 0.0
  %500 = vmatmul.mubr.f32.gmra.mrb[0].mxu0 %v171
  %v501 = vpop.f32.mrb[0].mxu0
  %v502 = vadd.f32 %v98, %v501
  %v503 = vpop.f32.mrb[0].mxu0
  %504 = vmatprep.mubr.f32.mxu0 0.0
  %505 = vmatmul.mubr.f32.gmra.mrb[0].mxu0 %v174
  %v506 = vpop.f32.mrb[0].mxu0
  %v507 = vadd.f32 %v98, %v506
  %v508 = vpop.f32.mrb[0].mxu0
  %509 = vmatprep.mubr.f32.mxu0 0.0
  %510 = vmatmul.mubr.f32.gmra.mrb[0].mxu0 %v177
  %v511 = vpop.f32.mrb[0].mxu0
  %v512 = vadd.f32 %v98, %v511
  %v513 = vpop.f32.mrb[0].mxu0
  %514 = vmatprep.mubr.f32.mxu0 0.0
  %515 = vmatmul.mubr.f32.gmra.mrb[0].mxu0 %v180
  %v516 = vpop.f32.mrb[0].mxu0
  %v517 = vadd.f32 %v98, %v516
  %v518 = vpop.f32.mrb[0].mxu0
  %519 = vmatprep.mubr.f32.mxu0 0.0
  %520 = vmatmul.mubr.f32.gmra.mrb[0].mxu0 %v183
  %v521 = vpop.f32.mrb[0].mxu0
  %v522 = vadd.f32 %v98, %v521
  %v523 = vpop.f32.mrb[0].mxu0
  %524 = vmatprep.mubr.f32.mxu0 0.0
  %525 = vmatmul.mubr.f32.gmra.mrb[0].mxu0 %v186
  %v526 = vpop.f32.mrb[0].mxu0
  %v527 = vadd.f32 %v98, %v526
  %v528 = vpop.f32.mrb[0].mxu0
  %529 = vmatprep.mubr.f32.mxu0 0.0
  %530 = vmatmul.mubr.f32.gmra.mrb[0].mxu0 %v189
  %v531 = vpop.f32.mrb[0].mxu0
  %v532 = vadd.f32 %v98, %v531
  %v533 = vpop.f32.mrb[0].mxu0
  %534 = vmatprep.mubr.f32.mxu0 0.0
  %535 = vmatmul.mubr.f32.gmra.mrb[0].mxu0 %v192
  %v536 = vpop.f32.mrb[0].mxu0
  %v537 = vadd.f32 %v98, %v536
  %v538 = vpop.f32.mrb[0].mxu0
  %539 = vmatprep.mubr.f32.mxu0 0.0
  %540 = vmatmul.mubr.f32.gmra.mrb[0].mxu0 %v195
  %v541 = vpop.f32.mrb[0].mxu0
  %v542 = vadd.f32 %v98, %v541
  %v543 = vpop.f32.mrb[0].mxu0
  %544 = vmatprep.mubr.f32.mxu0 0.0
  %545 = vmatmul.mubr.f32.gmra.mrb[0].mxu0 %v198
  %v546 = vpop.f32.mrb[0].mxu0
  %v547 = vadd.f32 %v98, %v546
  %v548 = vpop.f32.mrb[0].mxu0
  %549 = vmatprep.mubr.f32.mxu0 0.0
  %550 = vmatmul.mubr.f32.gmra.mrb[0].mxu0 %v201
  %v551 = vpop.f32.mrb[0].mxu0
  %v552 = vadd.f32 %v98, %v551
  %v553 = vpop.f32.mrb[0].mxu0
  %554 = vmatprep.mubr.f32.mxu0 0.0
  %555 = vmatmul.mubr.f32.gmra.mrb[0].mxu0 %v204
  %v556 = vpop.f32.mrb[0].mxu0
  %v557 = vadd.f32 %v98, %v556
  %v558 = vpop.f32.mrb[0].mxu0
  %559 = vmatprep.mubr.f32.mxu0 0.0
  %560 = vmatmul.mubr.f32.gmra.mrb[0].mxu0 %v207
  %v561 = vpop.f32.mrb[0].mxu0
  %v562 = vadd.f32 %v98, %v561
  %v563 = vpop.f32.mrb[0].mxu0
  %564 = vmatprep.mubr.f32.mxu0 0.0
  %565 = vmatmul.mubr.f32.gmra.mrb[0].mxu0 %v210
  %v566 = vpop.f32.mrb[0].mxu0
  %v567 = vadd.f32 %v98, %v566
  %v568 = vpop.f32.mrb[0].mxu0
  %569 = vmatprep.mubr.f32.mxu0 0.0
  %570 = vmatmul.mubr.f32.gmra.mrb[0].mxu0 %v213
  %v571 = vpop.f32.mrb[0].mxu0
  %v572 = vadd.f32 %v98, %v571
  %v573 = vpop.f32.mrb[0].mxu0
  %574 = vmatprep.mubr.f32.mxu0 0.0
  %575 = vmatmul.mubr.f32.gmra.mrb[0].mxu0 %v216
  %v576 = vpop.f32.mrb[0].mxu0
  %v577 = vadd.f32 %v98, %v576
  %v578 = vpop.f32.mrb[0].mxu0
  %579 = vmatprep.mubr.f32.mxu0 0.0
  %580 = vmatmul.mubr.f32.gmra.mrb[0].mxu0 %v219
  %v581 = vpop.f32.mrb[0].mxu0
  %v582 = vadd.f32 %v98, %v581
  %v583 = vpop.f32.mrb[0].mxu0
  %584 = vmatprep.mubr.f32.mxu0 0.0
  %585 = vmatmul.mubr.f32.gmra.mrb[0].mxu0 %v222
  %v586 = vpop.f32.mrb[0].mxu0
  %v587 = vadd.f32 %v98, %v586
  %v588 = vpop.f32.mrb[0].mxu0
  %589 = vmatprep.mubr.f32.mxu0 0.0
  %590 = vmatmul.mubr.f32.gmra.mrb[0].mxu0 %v225
  %v591 = vpop.f32.mrb[0].mxu0
  %v592 = vadd.f32 %v98, %v591
  %v593 = vpop.f32.mrb[0].mxu0
  %594 = vmatprep.mubr.f32.mxu0 0.0
  %595 = vmatmul.mubr.f32.gmra.mrb[0].mxu0 %v228
  %v596 = vpop.f32.mrb[0].mxu0
  %v597 = vadd.f32 %v98, %v596
  %v598 = vpop.f32.mrb[0].mxu0
  %599 = vmatprep.mubr.f32.mxu0 0.0
  %600 = vmatmul.mubr.f32.gmra.mrb[0].mxu0 %v231
  %v601 = vpop.f32.mrb[0].mxu0
  %v602 = vadd.f32 %v98, %v601
  %v603 = vpop.f32.mrb[0].mxu0
  %604 = vmatprep.mubr.f32.mxu0 0.0
  %605 = vmatmul.mubr.f32.gmra.mrb[0].mxu0 %v234
  %v606 = vpop.f32.mrb[0].mxu0
  %v607 = vadd.f32 %v98, %v606
  %v608 = vpop.f32.mrb[0].mxu0
  %609 = vmatprep.mubr.f32.mxu0 0.0
  %610 = vmatmul.mubr.f32.gmra.mrb[0].mxu0 %v237
  %v611 = vpop.f32.mrb[0].mxu0
  %v612 = vadd.f32 %v98, %v611
  %v613 = vpop.f32.mrb[0].mxu0
  %614 = vmatprep.mubr.f32.mxu0 0.0
  %615 = vmatmul.mubr.f32.gmra.mrb[0].mxu0 %v240
  %v616 = vpop.f32.mrb[0].mxu0
  %v617 = vadd.f32 %v98, %v616
  %v618 = vpop.f32.mrb[0].mxu0
  %619 = vmatprep.mubr.f32.mxu0 0.0
  %620 = vmatmul.mubr.f32.gmra.mrb[0].mxu0 %v243
  %v621 = vpop.f32.mrb[0].mxu0
  %v622 = vadd.f32 %v98, %v621
  %v623 = vpop.f32.mrb[0].mxu0
  %624 = vmatprep.mubr.f32.mxu0 0.0
  %625 = vmatmul.mubr.f32.gmra.mrb[0].mxu0 %v246
  %v626 = vpop.f32.mrb[0].mxu0
  %v627 = vadd.f32 %v98, %v626
  %v628 = vpop.f32.mrb[0].mxu0
  %629 = vmatprep.mubr.f32.mxu0 0.0
  %630 = vmatmul.mubr.f32.gmra.mrb[0].mxu0 %v249
  %v631 = vpop.f32.mrb[0].mxu0
  %v632 = vadd.f32 %v98, %v631
  %v633 = vpop.f32.mrb[0].mxu0
  %634 = vmatprep.mubr.f32.mxu0 0.0
  %635 = vmatmul.mubr.f32.gmra.mrb[0].mxu0 %v252
  %v636 = vpop.f32.mrb[0].mxu0
  %v637 = vadd.f32 %v98, %v636
  %v638 = vpop.f32.mrb[0].mxu0
  %639 = vmatprep.mubr.f32.mxu0 0.0
  %640 = vmatmul.mubr.f32.gmra.mrb[0].mxu0 %v255
  %v641 = vpop.f32.mrb[0].mxu0
  %v642 = vadd.f32 %v98, %v641
  %v643 = vpop.f32.mrb[0].mxu0
  %644 = vmatprep.mubr.f32.mxu0 0.0
  %645 = vmatmul.mubr.f32.gmra.mrb[0].mxu0 %v258
  %v646 = vpop.f32.mrb[0].mxu0
  %v647 = vadd.f32 %v98, %v646
  %v648 = vpop.f32.mrb[0].mxu0
  %649 = vmatprep.mubr.f32.mxu0 0.0
  %650 = vmatmul.mubr.f32.gmra.mrb[0].mxu0 %v261
  %v651 = vpop.f32.mrb[0].mxu0
  %v652 = vadd.f32 %v98, %v651
  %v653 = vpop.f32.mrb[0].mxu0
  %654 = vmatprep.mubr.f32.mxu0 0.0
  %655 = vmatmul.mubr.f32.gmra.mrb[0].mxu0 %v264
  %v656 = vpop.f32.mrb[0].mxu0
  %v657 = vadd.f32 %v98, %v656
  %v658 = vpop.f32.mrb[0].mxu0
  %659 = vmatprep.mubr.f32.mxu0 0.0
  %660 = vmatmul.mubr.f32.gmra.mrb[0].mxu0 %v267
  %v661 = vpop.f32.mrb[0].mxu0
  %v662 = vadd.f32 %v98, %v661
  %v663 = vpop.f32.mrb[0].mxu0
  %664 = vmatprep.mubr.f32.mxu0 0.0
  %665 = vmatmul.mubr.f32.gmra.mrb[0].mxu0 %v270
  %v666 = vpop.f32.mrb[0].mxu0
  %v667 = vadd.f32 %v98, %v666
  %v668 = vpop.f32.mrb[0].mxu0
  %669 = vmatprep.mubr.f32.mxu0 0.0
  %670 = vmatmul.mubr.f32.gmra.mrb[0].mxu0 %v273
  %v671 = vpop.f32.mrb[0].mxu0
  %v672 = vadd.f32 %v98, %v671
  %v673 = vpop.f32.mrb[0].mxu0
  %674 = vmatprep.mubr.f32.mxu0 0.0
  %675 = vmatmul.mubr.f32.gmra.mrb[0].mxu0 %v276
  %v676 = vpop.f32.mrb[0].mxu0
  %v677 = vadd.f32 %v98, %v676
  %v678 = vpop.f32.mrb[0].mxu0
  %679 = vmatprep.mubr.f32.mxu0 0.0
  %680 = vmatmul.mubr.f32.gmra.mrb[0].mxu0 %v279
  %v681 = vpop.f32.mrb[0].mxu0
  %v682 = vadd.f32 %v98, %v681
  %v683 = vpop.f32.mrb[0].mxu0
  %684 = vmatprep.mubr.f32.mxu0 0.0
  %685 = vmatmul.mubr.f32.gmra.mrb[0].mxu0 %v282
  %v686 = vpop.f32.mrb[0].mxu0
  %v687 = vadd.f32 %v98, %v686
  %v688 = vpop.f32.mrb[0].mxu0
  %689 = vmatprep.mubr.f32.mxu0 0.0
  %690 = vmatmul.mubr.f32.gmra.mrb[0].mxu0 %v285
  %v691 = vpop.f32.mrb[0].mxu0
  %v692 = vadd.f32 %v98, %v691
  %v693 = vpop.f32.mrb[0].mxu0
  %694 = vmatprep.mubr.f32.mxu0 0.0
  %695 = vmatmul.mubr.f32.gmra.mrb[0].mxu0 %v288
  %v696 = vpop.f32.mrb[0].mxu0
  %v697 = vadd.f32 %v98, %v696
  %v698 = vpop.f32.mrb[0].mxu0
  %699 = vdwg.mxu0
  %v700 = vmul.f32 %v387, 0.5
  %v701 = vmul.f32 %v392, 0.5
  %v702 = vmul.f32 %v397, 0.5
  %v703 = vmul.f32 %v402, 0.5
  %v704 = vmul.f32 %v407, 0.5
  %v705 = vmul.f32 %v412, 0.5
  %v706 = vmul.f32 %v417, 0.5
  %v707 = vmul.f32 %v422, 0.5
  %v708 = vmul.f32 %v427, 0.5
  %v709 = vmul.f32 %v432, 0.5
  %v710 = vmul.f32 %v437, 0.5
  %v711 = vmul.f32 %v442, 0.5
  %v712 = vmul.f32 %v447, 0.5
  %v713 = vmul.f32 %v452, 0.5
  %v714 = vmul.f32 %v457, 0.5
  %v715 = vmul.f32 %v462, 0.5
  %v716 = vmul.f32 %v467, 0.5
  %v717 = vmul.f32 %v472, 0.5
  %v718 = vmul.f32 %v477, 0.5
  %v719 = vmul.f32 %v482, 0.5
  %v720 = vmul.f32 %v487, 0.5
  %v721 = vmul.f32 %v492, 0.5
  %v722 = vmul.f32 %v497, 0.5
  %v723 = vmul.f32 %v502, 0.5
  %v724 = vmul.f32 %v507, 0.5
  %v725 = vmul.f32 %v512, 0.5
  %v726 = vmul.f32 %v517, 0.5
  %v727 = vmul.f32 %v522, 0.5
  %v728 = vmul.f32 %v527, 0.5
  %v729 = vmul.f32 %v532, 0.5
  %v730 = vmul.f32 %v537, 0.5
  %v731 = vmul.f32 %v542, 0.5
  %v732 = vmul.f32 %v547, 0.5
  %v733 = vmul.f32 %v552, 0.5
  %v734 = vmul.f32 %v557, 0.5
  %v735 = vmul.f32 %v562, 0.5
  %v736 = vmul.f32 %v567, 0.5
  %v737 = vmul.f32 %v572, 0.5
  %v738 = vmul.f32 %v577, 0.5
  %v739 = vmul.f32 %v582, 0.5
  %v740 = vmul.f32 %v587, 0.5
  %v741 = vmul.f32 %v592, 0.5
  %v742 = vmul.f32 %v597, 0.5
  %v743 = vmul.f32 %v602, 0.5
  %v744 = vmul.f32 %v607, 0.5
  %v745 = vmul.f32 %v612, 0.5
  %v746 = vmul.f32 %v617, 0.5
  %v747 = vmul.f32 %v622, 0.5
  %v748 = vmul.f32 %v627, 0.5
  %v749 = vmul.f32 %v632, 0.5
  %v750 = vmul.f32 %v637, 0.5
  %v751 = vmul.f32 %v642, 0.5
  %v752 = vmul.f32 %v647, 0.5
  %v753 = vmul.f32 %v652, 0.5
  %v754 = vmul.f32 %v657, 0.5
  %v755 = vmul.f32 %v662, 0.5
  %v756 = vmul.f32 %v667, 0.5
  %v757 = vmul.f32 %v672, 0.5
  %v758 = vmul.f32 %v677, 0.5
  %v759 = vmul.f32 %v682, 0.5
  %v760 = vmul.f32 %v687, 0.5
  %v761 = vmul.f32 %v692, 0.5
  %v762 = vmul.f32 %v697, 0.5
  %v763 = vmul.f32 %v387, 0.70710677
  %v764 = vmul.f32 %v392, 0.70710677
  %v765 = vmul.f32 %v397, 0.70710677
  %v766 = vmul.f32 %v402, 0.70710677
  %v767 = vmul.f32 %v407, 0.70710677
  %v768 = vmul.f32 %v412, 0.70710677
  %v769 = vmul.f32 %v417, 0.70710677
  %v770 = vmul.f32 %v422, 0.70710677
  %v771 = vmul.f32 %v427, 0.70710677
  %v772 = vmul.f32 %v432, 0.70710677
  %v773 = vmul.f32 %v437, 0.70710677
  %v774 = vmul.f32 %v442, 0.70710677
  %v775 = vmul.f32 %v447, 0.70710677
  %v776 = vmul.f32 %v452, 0.70710677
  %v777 = vmul.f32 %v457, 0.70710677
  %v778 = vmul.f32 %v462, 0.70710677
  %v779 = vmul.f32 %v467, 0.70710677
  %v780 = vmul.f32 %v472, 0.70710677
  %v781 = vmul.f32 %v477, 0.70710677
  %v782 = vmul.f32 %v482, 0.70710677
  %v783 = vmul.f32 %v487, 0.70710677
  %v784 = vmul.f32 %v492, 0.70710677
  %v785 = vmul.f32 %v497, 0.70710677
  %v786 = vmul.f32 %v502, 0.70710677
  %v787 = vmul.f32 %v507, 0.70710677
  %v788 = vmul.f32 %v512, 0.70710677
  %v789 = vmul.f32 %v517, 0.70710677
  %v790 = vmul.f32 %v522, 0.70710677
  %v791 = vmul.f32 %v527, 0.70710677
  %v792 = vmul.f32 %v532, 0.70710677
  %v793 = vmul.f32 %v537, 0.70710677
  %v794 = vmul.f32 %v542, 0.70710677
  %v795 = vmul.f32 %v547, 0.70710677
  %v796 = vmul.f32 %v552, 0.70710677
  %v797 = vmul.f32 %v557, 0.70710677
  %v798 = vmul.f32 %v562, 0.70710677
  %v799 = vmul.f32 %v567, 0.70710677
  %v800 = vmul.f32 %v572, 0.70710677
  %v801 = vmul.f32 %v577, 0.70710677
  %v802 = vmul.f32 %v582, 0.70710677
  %v803 = vmul.f32 %v587, 0.70710677
  %v804 = vmul.f32 %v592, 0.70710677
  %v805 = vmul.f32 %v597, 0.70710677
  %v806 = vmul.f32 %v602, 0.70710677
  %v807 = vmul.f32 %v607, 0.70710677
  %v808 = vmul.f32 %v612, 0.70710677
  %v809 = vmul.f32 %v617, 0.70710677
  %v810 = vmul.f32 %v622, 0.70710677
  %v811 = vmul.f32 %v627, 0.70710677
  %v812 = vmul.f32 %v632, 0.70710677
  %v813 = vmul.f32 %v637, 0.70710677
  %v814 = vmul.f32 %v642, 0.70710677
  %v815 = vmul.f32 %v647, 0.70710677
  %v816 = vmul.f32 %v652, 0.70710677
  %v817 = vmul.f32 %v657, 0.70710677
  %v818 = vmul.f32 %v662, 0.70710677
  %v819 = vmul.f32 %v667, 0.70710677
  %v820 = vmul.f32 %v672, 0.70710677
  %v821 = vmul.f32 %v677, 0.70710677
  %v822 = vmul.f32 %v682, 0.70710677
  %v823 = vmul.f32 %v687, 0.70710677
  %v824 = vmul.f32 %v692, 0.70710677
  %v825 = vmul.f32 %v697, 0.70710677
  %v826 = verf.f32.pop %v763
  %v827 = verf.f32.pop %v764
  %v828 = verf.f32.pop %v765
  %v829 = verf.f32.pop %v766
  %v830 = verf.f32.pop %v767
  %v831 = verf.f32.pop %v768
  %v832 = verf.f32.pop %v769
  %v833 = verf.f32.pop %v770
  %v834 = verf.f32.pop %v771
  %v835 = verf.f32.pop %v772
  %v836 = verf.f32.pop %v773
  %v837 = verf.f32.pop %v774
  %v838 = verf.f32.pop %v775
  %v839 = verf.f32.pop %v776
  %v840 = verf.f32.pop %v777
  %v841 = verf.f32.pop %v778
  %v842 = verf.f32.pop %v779
  %v843 = verf.f32.pop %v780
  %v844 = verf.f32.pop %v781
  %v845 = verf.f32.pop %v782
  %v846 = verf.f32.pop %v783
  %v847 = verf.f32.pop %v784
  %v848 = verf.f32.pop %v785
  %v849 = verf.f32.pop %v786
  %v850 = verf.f32.pop %v787
  %v851 = verf.f32.pop %v788
  %v852 = verf.f32.pop %v789
  %v853 = verf.f32.pop %v790
  %v854 = verf.f32.pop %v791
  %v855 = verf.f32.pop %v792
  %v856 = verf.f32.pop %v793
  %v857 = verf.f32.pop %v794
  %v858 = verf.f32.pop %v795
  %v859 = verf.f32.pop %v796
  %v860 = verf.f32.pop %v797
  %v861 = verf.f32.pop %v798
  %v862 = verf.f32.pop %v799
  %v863 = verf.f32.pop %v800
  %v864 = verf.f32.pop %v801
  %v865 = verf.f32.pop %v802
  %v866 = verf.f32.pop %v803
  %v867 = verf.f32.pop %v804
  %v868 = verf.f32.pop %v805
  %v869 = verf.f32.pop %v806
  %v870 = verf.f32.pop %v807
  %v871 = verf.f32.pop %v808
  %v872 = verf.f32.pop %v809
  %v873 = verf.f32.pop %v810
  %v874 = verf.f32.pop %v811
  %v875 = verf.f32.pop %v812
  %v876 = verf.f32.pop %v813
  %v877 = verf.f32.pop %v814
  %v878 = verf.f32.pop %v815
  %v879 = verf.f32.pop %v816
  %v880 = verf.f32.pop %v817
  %v881 = verf.f32.pop %v818
  %v882 = verf.f32.pop %v819
  %v883 = verf.f32.pop %v820
  %v884 = verf.f32.pop %v821
  %v885 = verf.f32.pop %v822
  %v886 = verf.f32.pop %v823
  %v887 = verf.f32.pop %v824
  %v888 = verf.f32.pop %v825
  %v889 = vadd.f32 %v826, 1.0
  %v890 = vadd.f32 %v827, 1.0
  %v891 = vadd.f32 %v828, 1.0
  %v892 = vadd.f32 %v829, 1.0
  %v893 = vadd.f32 %v830, 1.0
  %v894 = vadd.f32 %v831, 1.0
  %v895 = vadd.f32 %v832, 1.0
  %v896 = vadd.f32 %v833, 1.0
  %v897 = vadd.f32 %v834, 1.0
  %v898 = vadd.f32 %v835, 1.0
  %v899 = vadd.f32 %v836, 1.0
  %v900 = vadd.f32 %v837, 1.0
  %v901 = vadd.f32 %v838, 1.0
  %v902 = vadd.f32 %v839, 1.0
  %v903 = vadd.f32 %v840, 1.0
  %v904 = vadd.f32 %v841, 1.0
  %v905 = vadd.f32 %v842, 1.0
  %v906 = vadd.f32 %v843, 1.0
  %v907 = vadd.f32 %v844, 1.0
  %v908 = vadd.f32 %v845, 1.0
  %v909 = vadd.f32 %v846, 1.0
  %v910 = vadd.f32 %v847, 1.0
  %v911 = vadd.f32 %v848, 1.0
  %v912 = vadd.f32 %v849, 1.0
  %v913 = vadd.f32 %v850, 1.0
  %v914 = vadd.f32 %v851, 1.0
  %v915 = vadd.f32 %v852, 1.0
  %v916 = vadd.f32 %v853, 1.0
  %v917 = vadd.f32 %v854, 1.0
  %v918 = vadd.f32 %v855, 1.0
  %v919 = vadd.f32 %v856, 1.0
  %v920 = vadd.f32 %v857, 1.0
  %v921 = vadd.f32 %v858, 1.0
  %v922 = vadd.f32 %v859, 1.0
  %v923 = vadd.f32 %v860, 1.0
  %v924 = vadd.f32 %v861, 1.0
  %v925 = vadd.f32 %v862, 1.0
  %v926 = vadd.f32 %v863, 1.0
  %v927 = vadd.f32 %v864, 1.0
  %v928 = vadd.f32 %v865, 1.0
  %v929 = vadd.f32 %v866, 1.0
  %v930 = vadd.f32 %v867, 1.0
  %v931 = vadd.f32 %v868, 1.0
  %v932 = vadd.f32 %v869, 1.0
  %v933 = vadd.f32 %v870, 1.0
  %v934 = vadd.f32 %v871, 1.0
  %v935 = vadd.f32 %v872, 1.0
  %v936 = vadd.f32 %v873, 1.0
  %v937 = vadd.f32 %v874, 1.0
  %v938 = vadd.f32 %v875, 1.0
  %v939 = vadd.f32 %v876, 1.0
  %v940 = vadd.f32 %v877, 1.0
  %v941 = vadd.f32 %v878, 1.0
  %v942 = vadd.f32 %v879, 1.0
  %v943 = vadd.f32 %v880, 1.0
  %v944 = vadd.f32 %v881, 1.0
  %v945 = vadd.f32 %v882, 1.0
  %v946 = vadd.f32 %v883, 1.0
  %v947 = vadd.f32 %v884, 1.0
  %v948 = vadd.f32 %v885, 1.0
  %v949 = vadd.f32 %v886, 1.0
  %v950 = vadd.f32 %v887, 1.0
  %v951 = vadd.f32 %v888, 1.0
  %v952 = vmul.f32 %v700, %v889
  %v953 = vmul.f32 %v701, %v890
  %v954 = vmul.f32 %v702, %v891
  %v955 = vmul.f32 %v703, %v892
  %v956 = vmul.f32 %v704, %v893
  %v957 = vmul.f32 %v705, %v894
  %v958 = vmul.f32 %v706, %v895
  %v959 = vmul.f32 %v707, %v896
  %v960 = vmul.f32 %v708, %v897
  %v961 = vmul.f32 %v709, %v898
  %v962 = vmul.f32 %v710, %v899
  %v963 = vmul.f32 %v711, %v900
  %v964 = vmul.f32 %v712, %v901
  %v965 = vmul.f32 %v713, %v902
  %v966 = vmul.f32 %v714, %v903
  %v967 = vmul.f32 %v715, %v904
  %v968 = vmul.f32 %v716, %v905
  %v969 = vmul.f32 %v717, %v906
  %v970 = vmul.f32 %v718, %v907
  %v971 = vmul.f32 %v719, %v908
  %v972 = vmul.f32 %v720, %v909
  %v973 = vmul.f32 %v721, %v910
  %v974 = vmul.f32 %v722, %v911
  %v975 = vmul.f32 %v723, %v912
  %v976 = vmul.f32 %v724, %v913
  %v977 = vmul.f32 %v725, %v914
  %v978 = vmul.f32 %v726, %v915
  %v979 = vmul.f32 %v727, %v916
  %v980 = vmul.f32 %v728, %v917
  %v981 = vmul.f32 %v729, %v918
  %v982 = vmul.f32 %v730, %v919
  %v983 = vmul.f32 %v731, %v920
  %v984 = vmul.f32 %v732, %v921
  %v985 = vmul.f32 %v733, %v922
  %v986 = vmul.f32 %v734, %v923
  %v987 = vmul.f32 %v735, %v924
  %v988 = vmul.f32 %v736, %v925
  %v989 = vmul.f32 %v737, %v926
  %v990 = vmul.f32 %v738, %v927
  %v991 = vmul.f32 %v739, %v928
  %v992 = vmul.f32 %v740, %v929
  %v993 = vmul.f32 %v741, %v930
  %v994 = vmul.f32 %v742, %v931
  %v995 = vmul.f32 %v743, %v932
  %v996 = vmul.f32 %v744, %v933
  %v997 = vmul.f32 %v745, %v934
  %v998 = vmul.f32 %v746, %v935
  %v999 = vmul.f32 %v747, %v936
  %v1000 = vmul.f32 %v748, %v937
  %v1001 = vmul.f32 %v749, %v938
  %v1002 = vmul.f32 %v750, %v939
  %v1003 = vmul.f32 %v751, %v940
  %v1004 = vmul.f32 %v752, %v941
  %v1005 = vmul.f32 %v753, %v942
  %v1006 = vmul.f32 %v754, %v943
  %v1007 = vmul.f32 %v755, %v944
  %v1008 = vmul.f32 %v756, %v945
  %v1009 = vmul.f32 %v757, %v946
  %v1010 = vmul.f32 %v758, %v947
  %v1011 = vmul.f32 %v759, %v948
  %v1012 = vmul.f32 %v760, %v949
  %v1013 = vmul.f32 %v761, %v950
  %v1014 = vmul.f32 %v762, %v951
  %v1015 = vld [vmem:[%s3] sm:$0xff]
  %v1016 = vld [vmem:[%s3 + $0x8] sm:$0x3]
  %vm1017 = vcmask 523264
  %v1019 = vsel %vm1017, %v952, 0
  %v1022 = vsel %vm1017, %v953, 0
  %v1025 = vsel %vm1017, %v954, 0
  %v1028 = vsel %vm1017, %v955, 0
  %v1031 = vsel %vm1017, %v956, 0
  %v1034 = vsel %vm1017, %v957, 0
  %v1037 = vsel %vm1017, %v958, 0
  %v1040 = vsel %vm1017, %v959, 0
  %v1043 = vsel %vm1017, %v960, 0
  %v1046 = vsel %vm1017, %v961, 0
  %v1049 = vsel %vm1017, %v962, 0
  %v1052 = vsel %vm1017, %v963, 0
  %v1055 = vsel %vm1017, %v964, 0
  %v1058 = vsel %vm1017, %v965, 0
  %v1061 = vsel %vm1017, %v966, 0
  %v1064 = vsel %vm1017, %v967, 0
  %v1067 = vsel %vm1017, %v968, 0
  %v1070 = vsel %vm1017, %v969, 0
  %v1073 = vsel %vm1017, %v970, 0
  %v1076 = vsel %vm1017, %v971, 0
  %v1079 = vsel %vm1017, %v972, 0
  %v1082 = vsel %vm1017, %v973, 0
  %v1085 = vsel %vm1017, %v974, 0
  %v1088 = vsel %vm1017, %v975, 0
  %v1091 = vsel %vm1017, %v976, 0
  %v1094 = vsel %vm1017, %v977, 0
  %v1097 = vsel %vm1017, %v978, 0
  %v1100 = vsel %vm1017, %v979, 0
  %v1103 = vsel %vm1017, %v980, 0
  %v1106 = vsel %vm1017, %v981, 0
  %v1109 = vsel %vm1017, %v982, 0
  %v1112 = vsel %vm1017, %v983, 0
  %v1115 = vsel %vm1017, %v984, 0
  %v1118 = vsel %vm1017, %v985, 0
  %v1121 = vsel %vm1017, %v986, 0
  %v1124 = vsel %vm1017, %v987, 0
  %v1127 = vsel %vm1017, %v988, 0
  %v1130 = vsel %vm1017, %v989, 0
  %v1133 = vsel %vm1017, %v990, 0
  %v1136 = vsel %vm1017, %v991, 0
  %v1139 = vsel %vm1017, %v992, 0
  %v1142 = vsel %vm1017, %v993, 0
  %v1145 = vsel %vm1017, %v994, 0
  %v1148 = vsel %vm1017, %v995, 0
  %v1151 = vsel %vm1017, %v996, 0
  %v1154 = vsel %vm1017, %v997, 0
  %v1157 = vsel %vm1017, %v998, 0
  %v1160 = vsel %vm1017, %v999, 0
  %v1163 = vsel %vm1017, %v1000, 0
  %v1166 = vsel %vm1017, %v1001, 0
  %v1169 = vsel %vm1017, %v1002, 0
  %v1172 = vsel %vm1017, %v1003, 0
  %v1175 = vsel %vm1017, %v1004, 0
  %v1178 = vsel %vm1017, %v1005, 0
  %v1181 = vsel %vm1017, %v1006, 0
  %v1184 = vsel %vm1017, %v1007, 0
  %v1187 = vsel %vm1017, %v1008, 0
  %v1190 = vsel %vm1017, %v1009, 0
  %v1193 = vsel %vm1017, %v1010, 0
  %v1196 = vsel %vm1017, %v1011, 0
  %v1199 = vsel %vm1017, %v1012, 0
  %v1202 = vsel %vm1017, %v1013, 0
  %v1205 = vsel %vm1017, %v1014, 0
  %v1208 = vsel %vm1017, %v1015, 0
  %v1211 = vsel %vm1017, %v1016, 0
  %1213 = vmatprep.subr.mxu0 0.0
  %1214 = vmatpush1.xpose.msra.mxu0 %v1208
  %1215 = vmatprep.subr.mxu0 0.0
  %1216 = vmatpush1.xpose.msra.mxu0 %v1211
  %1217 = vmatprep.subr.mxu0 0.0
  %1218 = vmatpush1.xpose.msra.mxu0 0.0
  %1219 = vmatprep.subr.mxu0 0.0
  %1220 = vmatpush1.xpose.msra.mxu0 0.0
  %1221 = vmatprep.subr.mxu0 0.0
  %1222 = vmatpush1.xpose.msra.mxu0 0.0
  %1223 = vmatprep.subr.mxu0 0.0
  %1224 = vmatpush1.xpose.msra.mxu0 0.0
  %1225 = vmatprep.subr.mxu0 0.0
  %1226 = vmatpush1.xpose.msra.mxu0 0.0
  %1227 = vmatprep.subr.mxu0 0.0
  %1228 = vmatpush1.xpose.msra.mxu0 0.0
  %1229 = vmatprep.subr.mxu0 0.0
  %1230 = vmatpush1.xpose.msra.mxu0 0.0
  %1231 = vmatprep.subr.mxu0 0.0
  %1232 = vmatpush1.xpose.msra.mxu0 0.0
  %1233 = vmatprep.subr.mxu0 0.0
  %1234 = vmatpush1.xpose.msra.mxu0 0.0
  %1235 = vmatprep.subr.mxu0 0.0
  %1236 = vmatpush1.xpose.msra.mxu0 0.0
  %1237 = vmatprep.subr.mxu0 0.0
  %1238 = vmatpush1.xpose.msra.mxu0 0.0
  %1239 = vmatprep.subr.mxu0 0.0
  %1240 = vmatpush1.xpose.msra.mxu0 0.0
  %1241 = vmatprep.subr.mxu0 0.0
  %1242 = vmatpush1.xpose.msra.mxu0 0.0
  %1243 = vmatprep.subr.mxu0 0.0
  %1244 = vmatpush1.xpose.msra.mxu0 0.0
  %1245 = vmatprep.subr.mxu0 0.0
  %1246 = vmatpush1.xpose.msra.mxu0 0.0
  %1247 = vmatprep.subr.mxu0 0.0
  %1248 = vmatpush1.xpose.msra.mxu0 0.0
  %1249 = vmatprep.subr.mxu0 0.0
  %1250 = vmatpush1.xpose.msra.mxu0 0.0
  %1251 = vmatprep.subr.mxu0 0.0
  %1252 = vmatpush1.xpose.msra.mxu0 0.0
  %1253 = vmatprep.subr.mxu0 0.0
  %1254 = vmatpush1.xpose.msra.mxu0 0.0
  %1255 = vmatprep.subr.mxu0 0.0
  %1256 = vmatpush1.xpose.msra.mxu0 0.0
  %1257 = vmatprep.subr.mxu0 0.0
  %1258 = vmatpush1.xpose.msra.mxu0 0.0
  %1259 = vmatprep.subr.mxu0 0.0
  %1260 = vmatpush1.xpose.msra.mxu0 0.0
  %1261 = vmatprep.subr.mxu0 0.0
  %1262 = vmatpush1.xpose.msra.mxu0 0.0
  %1263 = vmatprep.subr.mxu0 0.0
  %1264 = vmatpush1.xpose.msra.mxu0 0.0
  %1265 = vmatprep.subr.mxu0 0.0
  %1266 = vmatpush1.xpose.msra.mxu0 0.0
  %1267 = vmatprep.subr.mxu0 0.0
  %1268 = vmatpush1.xpose.msra.mxu0 0.0
  %1269 = vmatprep.subr.mxu0 0.0
  %1270 = vmatpush1.xpose.msra.mxu0 0.0
  %1271 = vmatprep.subr.mxu0 0.0
  %1272 = vmatpush1.xpose.msra.mxu0 0.0
  %1273 = vmatprep.subr.mxu0 0.0
  %1274 = vmatpush1.xpose.msra.mxu0 0.0
  %1275 = vmatprep.subr.mxu0 0.0
  %1276 = vmatpush1.xpose.msra.mxu0 0.0
  %1277 = vmatprep.mubr.f32.mxu0 0.0
  %1278 = vmatmul.mubr.f32.gmra.mrb[0].mxu0 %v1019
  %v1279 = vpop.f32.mrb[0].mxu0
  %v1280 = vadd.f32 0.0, %v1279
  %v1281 = vpop.f32.mrb[0].mxu0
  %1282 = vmatprep.mubr.f32.mxu0 0.0
  %1283 = vmatmul.mubr.f32.gmra.mrb[0].mxu0 %v1022
  %v1284 = vpop.f32.mrb[0].mxu0
  %v1285 = vadd.f32 0.0, %v1284
  %v1286 = vpop.f32.mrb[0].mxu0
  %1287 = vmatprep.mubr.f32.mxu0 0.0
  %1288 = vmatmul.mubr.f32.gmra.mrb[0].mxu0 %v1025
  %v1289 = vpop.f32.mrb[0].mxu0
  %v1290 = vadd.f32 0.0, %v1289
  %v1291 = vpop.f32.mrb[0].mxu0
  %1292 = vmatprep.mubr.f32.mxu0 0.0
  %1293 = vmatmul.mubr.f32.gmra.mrb[0].mxu0 %v1028
  %v1294 = vpop.f32.mrb[0].mxu0
  %v1295 = vadd.f32 0.0, %v1294
  %v1296 = vpop.f32.mrb[0].mxu0
  %1297 = vmatprep.mubr.f32.mxu0 0.0
  %1298 = vmatmul.mubr.f32.gmra.mrb[0].mxu0 %v1031
  %v1299 = vpop.f32.mrb[0].mxu0
  %v1300 = vadd.f32 0.0, %v1299
  %v1301 = vpop.f32.mrb[0].mxu0
  %1302 = vmatprep.mubr.f32.mxu0 0.0
  %1303 = vmatmul.mubr.f32.gmra.mrb[0].mxu0 %v1034
  %v1304 = vpop.f32.mrb[0].mxu0
  %v1305 = vadd.f32 0.0, %v1304
  %v1306 = vpop.f32.mrb[0].mxu0
  %1307 = vmatprep.mubr.f32.mxu0 0.0
  %1308 = vmatmul.mubr.f32.gmra.mrb[0].mxu0 %v1037
  %v1309 = vpop.f32.mrb[0].mxu0
  %v1310 = vadd.f32 0.0, %v1309
  %v1311 = vpop.f32.mrb[0].mxu0
  %1312 = vmatprep.mubr.f32.mxu0 0.0
  %1313 = vmatmul.mubr.f32.gmra.mrb[0].mxu0 %v1040
  %v1314 = vpop.f32.mrb[0].mxu0
  %v1315 = vadd.f32 0.0, %v1314
  %v1316 = vpop.f32.mrb[0].mxu0
  %1317 = vmatprep.mubr.f32.mxu0 0.0
  %1318 = vmatmul.mubr.f32.gmra.mrb[0].mxu0 %v1043
  %v1319 = vpop.f32.mrb[0].mxu0
  %v1320 = vadd.f32 0.0, %v1319
  %v1321 = vpop.f32.mrb[0].mxu0
  %1322 = vmatprep.mubr.f32.mxu0 0.0
  %1323 = vmatmul.mubr.f32.gmra.mrb[0].mxu0 %v1046
  %v1324 = vpop.f32.mrb[0].mxu0
  %v1325 = vadd.f32 0.0, %v1324
  %v1326 = vpop.f32.mrb[0].mxu0
  %1327 = vmatprep.mubr.f32.mxu0 0.0
  %1328 = vmatmul.mubr.f32.gmra.mrb[0].mxu0 %v1049
  %v1329 = vpop.f32.mrb[0].mxu0
  %v1330 = vadd.f32 0.0, %v1329
  %v1331 = vpop.f32.mrb[0].mxu0
  %1332 = vmatprep.mubr.f32.mxu0 0.0
  %1333 = vmatmul.mubr.f32.gmra.mrb[0].mxu0 %v1052
  %v1334 = vpop.f32.mrb[0].mxu0
  %v1335 = vadd.f32 0.0, %v1334
  %v1336 = vpop.f32.mrb[0].mxu0
  %1337 = vmatprep.mubr.f32.mxu0 0.0
  %1338 = vmatmul.mubr.f32.gmra.mrb[0].mxu0 %v1055
  %v1339 = vpop.f32.mrb[0].mxu0
  %v1340 = vadd.f32 0.0, %v1339
  %v1341 = vpop.f32.mrb[0].mxu0
  %1342 = vmatprep.mubr.f32.mxu0 0.0
  %1343 = vmatmul.mubr.f32.gmra.mrb[0].mxu0 %v1058
  %v1344 = vpop.f32.mrb[0].mxu0
  %v1345 = vadd.f32 0.0, %v1344
  %v1346 = vpop.f32.mrb[0].mxu0
  %1347 = vmatprep.mubr.f32.mxu0 0.0
  %1348 = vmatmul.mubr.f32.gmra.mrb[0].mxu0 %v1061
  %v1349 = vpop.f32.mrb[0].mxu0
  %v1350 = vadd.f32 0.0, %v1349
  %v1351 = vpop.f32.mrb[0].mxu0
  %1352 = vmatprep.mubr.f32.mxu0 0.0
  %1353 = vmatmul.mubr.f32.gmra.mrb[0].mxu0 %v1064
  %v1354 = vpop.f32.mrb[0].mxu0
  %v1355 = vadd.f32 0.0, %v1354
  %v1356 = vpop.f32.mrb[0].mxu0
  %1357 = vmatprep.mubr.f32.mxu0 0.0
  %1358 = vmatmul.mubr.f32.gmra.mrb[0].mxu0 %v1067
  %v1359 = vpop.f32.mrb[0].mxu0
  %v1360 = vadd.f32 0.0, %v1359
  %v1361 = vpop.f32.mrb[0].mxu0
  %1362 = vmatprep.mubr.f32.mxu0 0.0
  %1363 = vmatmul.mubr.f32.gmra.mrb[0].mxu0 %v1070
  %v1364 = vpop.f32.mrb[0].mxu0
  %v1365 = vadd.f32 0.0, %v1364
  %v1366 = vpop.f32.mrb[0].mxu0
  %1367 = vmatprep.mubr.f32.mxu0 0.0
  %1368 = vmatmul.mubr.f32.gmra.mrb[0].mxu0 %v1073
  %v1369 = vpop.f32.mrb[0].mxu0
  %v1370 = vadd.f32 0.0, %v1369
  %v1371 = vpop.f32.mrb[0].mxu0
  %1372 = vmatprep.mubr.f32.mxu0 0.0
  %1373 = vmatmul.mubr.f32.gmra.mrb[0].mxu0 %v1076
  %v1374 = vpop.f32.mrb[0].mxu0
  %v1375 = vadd.f32 0.0, %v1374
  %v1376 = vpop.f32.mrb[0].mxu0
  %1377 = vmatprep.mubr.f32.mxu0 0.0
  %1378 = vmatmul.mubr.f32.gmra.mrb[0].mxu0 %v1079
  %v1379 = vpop.f32.mrb[0].mxu0
  %v1380 = vadd.f32 0.0, %v1379
  %v1381 = vpop.f32.mrb[0].mxu0
  %1382 = vmatprep.mubr.f32.mxu0 0.0
  %1383 = vmatmul.mubr.f32.gmra.mrb[0].mxu0 %v1082
  %v1384 = vpop.f32.mrb[0].mxu0
  %v1385 = vadd.f32 0.0, %v1384
  %v1386 = vpop.f32.mrb[0].mxu0
  %1387 = vmatprep.mubr.f32.mxu0 0.0
  %1388 = vmatmul.mubr.f32.gmra.mrb[0].mxu0 %v1085
  %v1389 = vpop.f32.mrb[0].mxu0
  %v1390 = vadd.f32 0.0, %v1389
  %v1391 = vpop.f32.mrb[0].mxu0
  %1392 = vmatprep.mubr.f32.mxu0 0.0
  %1393 = vmatmul.mubr.f32.gmra.mrb[0].mxu0 %v1088
  %v1394 = vpop.f32.mrb[0].mxu0
  %v1395 = vadd.f32 0.0, %v1394
  %v1396 = vpop.f32.mrb[0].mxu0
  %1397 = vmatprep.mubr.f32.mxu0 0.0
  %1398 = vmatmul.mubr.f32.gmra.mrb[0].mxu0 %v1091
  %v1399 = vpop.f32.mrb[0].mxu0
  %v1400 = vadd.f32 0.0, %v1399
  %v1401 = vpop.f32.mrb[0].mxu0
  %1402 = vmatprep.mubr.f32.mxu0 0.0
  %1403 = vmatmul.mubr.f32.gmra.mrb[0].mxu0 %v1094
  %v1404 = vpop.f32.mrb[0].mxu0
  %v1405 = vadd.f32 0.0, %v1404
  %v1406 = vpop.f32.mrb[0].mxu0
  %1407 = vmatprep.mubr.f32.mxu0 0.0
  %1408 = vmatmul.mubr.f32.gmra.mrb[0].mxu0 %v1097
  %v1409 = vpop.f32.mrb[0].mxu0
  %v1410 = vadd.f32 0.0, %v1409
  %v1411 = vpop.f32.mrb[0].mxu0
  %1412 = vmatprep.mubr.f32.mxu0 0.0
  %1413 = vmatmul.mubr.f32.gmra.mrb[0].mxu0 %v1100
  %v1414 = vpop.f32.mrb[0].mxu0
  %v1415 = vadd.f32 0.0, %v1414
  %v1416 = vpop.f32.mrb[0].mxu0
  %1417 = vmatprep.mubr.f32.mxu0 0.0
  %1418 = vmatmul.mubr.f32.gmra.mrb[0].mxu0 %v1103
  %v1419 = vpop.f32.mrb[0].mxu0
  %v1420 = vadd.f32 0.0, %v1419
  %v1421 = vpop.f32.mrb[0].mxu0
  %1422 = vmatprep.mubr.f32.mxu0 0.0
  %1423 = vmatmul.mubr.f32.gmra.mrb[0].mxu0 %v1106
  %v1424 = vpop.f32.mrb[0].mxu0
  %v1425 = vadd.f32 0.0, %v1424
  %v1426 = vpop.f32.mrb[0].mxu0
  %1427 = vmatprep.mubr.f32.mxu0 0.0
  %1428 = vmatmul.mubr.f32.gmra.mrb[0].mxu0 %v1109
  %v1429 = vpop.f32.mrb[0].mxu0
  %v1430 = vadd.f32 0.0, %v1429
  %v1431 = vpop.f32.mrb[0].mxu0
  %1432 = vmatprep.mubr.f32.mxu0 0.0
  %1433 = vmatmul.mubr.f32.gmra.mrb[0].mxu0 %v1112
  %v1434 = vpop.f32.mrb[0].mxu0
  %v1435 = vadd.f32 0.0, %v1434
  %v1436 = vpop.f32.mrb[0].mxu0
  %1437 = vmatprep.mubr.f32.mxu0 0.0
  %1438 = vmatmul.mubr.f32.gmra.mrb[0].mxu0 %v1115
  %v1439 = vpop.f32.mrb[0].mxu0
  %v1440 = vadd.f32 0.0, %v1439
  %v1441 = vpop.f32.mrb[0].mxu0
  %1442 = vmatprep.mubr.f32.mxu0 0.0
  %1443 = vmatmul.mubr.f32.gmra.mrb[0].mxu0 %v1118
  %v1444 = vpop.f32.mrb[0].mxu0
  %v1445 = vadd.f32 0.0, %v1444
  %v1446 = vpop.f32.mrb[0].mxu0
  %1447 = vmatprep.mubr.f32.mxu0 0.0
  %1448 = vmatmul.mubr.f32.gmra.mrb[0].mxu0 %v1121
  %v1449 = vpop.f32.mrb[0].mxu0
  %v1450 = vadd.f32 0.0, %v1449
  %v1451 = vpop.f32.mrb[0].mxu0
  %1452 = vmatprep.mubr.f32.mxu0 0.0
  %1453 = vmatmul.mubr.f32.gmra.mrb[0].mxu0 %v1124
  %v1454 = vpop.f32.mrb[0].mxu0
  %v1455 = vadd.f32 0.0, %v1454
  %v1456 = vpop.f32.mrb[0].mxu0
  %1457 = vmatprep.mubr.f32.mxu0 0.0
  %1458 = vmatmul.mubr.f32.gmra.mrb[0].mxu0 %v1127
  %v1459 = vpop.f32.mrb[0].mxu0
  %v1460 = vadd.f32 0.0, %v1459
  %v1461 = vpop.f32.mrb[0].mxu0
  %1462 = vmatprep.mubr.f32.mxu0 0.0
  %1463 = vmatmul.mubr.f32.gmra.mrb[0].mxu0 %v1130
  %v1464 = vpop.f32.mrb[0].mxu0
  %v1465 = vadd.f32 0.0, %v1464
  %v1466 = vpop.f32.mrb[0].mxu0
  %1467 = vmatprep.mubr.f32.mxu0 0.0
  %1468 = vmatmul.mubr.f32.gmra.mrb[0].mxu0 %v1133
  %v1469 = vpop.f32.mrb[0].mxu0
  %v1470 = vadd.f32 0.0, %v1469
  %v1471 = vpop.f32.mrb[0].mxu0
  %1472 = vmatprep.mubr.f32.mxu0 0.0
  %1473 = vmatmul.mubr.f32.gmra.mrb[0].mxu0 %v1136
  %v1474 = vpop.f32.mrb[0].mxu0
  %v1475 = vadd.f32 0.0, %v1474
  %v1476 = vpop.f32.mrb[0].mxu0
  %1477 = vmatprep.mubr.f32.mxu0 0.0
  %1478 = vmatmul.mubr.f32.gmra.mrb[0].mxu0 %v1139
  %v1479 = vpop.f32.mrb[0].mxu0
  %v1480 = vadd.f32 0.0, %v1479
  %v1481 = vpop.f32.mrb[0].mxu0
  %1482 = vmatprep.mubr.f32.mxu0 0.0
  %1483 = vmatmul.mubr.f32.gmra.mrb[0].mxu0 %v1142
  %v1484 = vpop.f32.mrb[0].mxu0
  %v1485 = vadd.f32 0.0, %v1484
  %v1486 = vpop.f32.mrb[0].mxu0
  %1487 = vmatprep.mubr.f32.mxu0 0.0
  %1488 = vmatmul.mubr.f32.gmra.mrb[0].mxu0 %v1145
  %v1489 = vpop.f32.mrb[0].mxu0
  %v1490 = vadd.f32 0.0, %v1489
  %v1491 = vpop.f32.mrb[0].mxu0
  %1492 = vmatprep.mubr.f32.mxu0 0.0
  %1493 = vmatmul.mubr.f32.gmra.mrb[0].mxu0 %v1148
  %v1494 = vpop.f32.mrb[0].mxu0
  %v1495 = vadd.f32 0.0, %v1494
  %v1496 = vpop.f32.mrb[0].mxu0
  %1497 = vmatprep.mubr.f32.mxu0 0.0
  %1498 = vmatmul.mubr.f32.gmra.mrb[0].mxu0 %v1151
  %v1499 = vpop.f32.mrb[0].mxu0
  %v1500 = vadd.f32 0.0, %v1499
  %v1501 = vpop.f32.mrb[0].mxu0
  %1502 = vmatprep.mubr.f32.mxu0 0.0
  %1503 = vmatmul.mubr.f32.gmra.mrb[0].mxu0 %v1154
  %v1504 = vpop.f32.mrb[0].mxu0
  %v1505 = vadd.f32 0.0, %v1504
  %v1506 = vpop.f32.mrb[0].mxu0
  %1507 = vmatprep.mubr.f32.mxu0 0.0
  %1508 = vmatmul.mubr.f32.gmra.mrb[0].mxu0 %v1157
  %v1509 = vpop.f32.mrb[0].mxu0
  %v1510 = vadd.f32 0.0, %v1509
  %v1511 = vpop.f32.mrb[0].mxu0
  %1512 = vmatprep.mubr.f32.mxu0 0.0
  %1513 = vmatmul.mubr.f32.gmra.mrb[0].mxu0 %v1160
  %v1514 = vpop.f32.mrb[0].mxu0
  %v1515 = vadd.f32 0.0, %v1514
  %v1516 = vpop.f32.mrb[0].mxu0
  %1517 = vmatprep.mubr.f32.mxu0 0.0
  %1518 = vmatmul.mubr.f32.gmra.mrb[0].mxu0 %v1163
  %v1519 = vpop.f32.mrb[0].mxu0
  %v1520 = vadd.f32 0.0, %v1519
  %v1521 = vpop.f32.mrb[0].mxu0
  %1522 = vmatprep.mubr.f32.mxu0 0.0
  %1523 = vmatmul.mubr.f32.gmra.mrb[0].mxu0 %v1166
  %v1524 = vpop.f32.mrb[0].mxu0
  %v1525 = vadd.f32 0.0, %v1524
  %v1526 = vpop.f32.mrb[0].mxu0
  %1527 = vmatprep.mubr.f32.mxu0 0.0
  %1528 = vmatmul.mubr.f32.gmra.mrb[0].mxu0 %v1169
  %v1529 = vpop.f32.mrb[0].mxu0
  %v1530 = vadd.f32 0.0, %v1529
  %v1531 = vpop.f32.mrb[0].mxu0
  %1532 = vmatprep.mubr.f32.mxu0 0.0
  %1533 = vmatmul.mubr.f32.gmra.mrb[0].mxu0 %v1172
  %v1534 = vpop.f32.mrb[0].mxu0
  %v1535 = vadd.f32 0.0, %v1534
  %v1536 = vpop.f32.mrb[0].mxu0
  %1537 = vmatprep.mubr.f32.mxu0 0.0
  %1538 = vmatmul.mubr.f32.gmra.mrb[0].mxu0 %v1175
  %v1539 = vpop.f32.mrb[0].mxu0
  %v1540 = vadd.f32 0.0, %v1539
  %v1541 = vpop.f32.mrb[0].mxu0
  %1542 = vmatprep.mubr.f32.mxu0 0.0
  %1543 = vmatmul.mubr.f32.gmra.mrb[0].mxu0 %v1178
  %v1544 = vpop.f32.mrb[0].mxu0
  %v1545 = vadd.f32 0.0, %v1544
  %v1546 = vpop.f32.mrb[0].mxu0
  %1547 = vmatprep.mubr.f32.mxu0 0.0
  %1548 = vmatmul.mubr.f32.gmra.mrb[0].mxu0 %v1181
  %v1549 = vpop.f32.mrb[0].mxu0
  %v1550 = vadd.f32 0.0, %v1549
  %v1551 = vpop.f32.mrb[0].mxu0
  %1552 = vmatprep.mubr.f32.mxu0 0.0
  %1553 = vmatmul.mubr.f32.gmra.mrb[0].mxu0 %v1184
  %v1554 = vpop.f32.mrb[0].mxu0
  %v1555 = vadd.f32 0.0, %v1554
  %v1556 = vpop.f32.mrb[0].mxu0
  %1557 = vmatprep.mubr.f32.mxu0 0.0
  %1558 = vmatmul.mubr.f32.gmra.mrb[0].mxu0 %v1187
  %v1559 = vpop.f32.mrb[0].mxu0
  %v1560 = vadd.f32 0.0, %v1559
  %v1561 = vpop.f32.mrb[0].mxu0
  %1562 = vmatprep.mubr.f32.mxu0 0.0
  %1563 = vmatmul.mubr.f32.gmra.mrb[0].mxu0 %v1190
  %v1564 = vpop.f32.mrb[0].mxu0
  %v1565 = vadd.f32 0.0, %v1564
  %v1566 = vpop.f32.mrb[0].mxu0
  %1567 = vmatprep.mubr.f32.mxu0 0.0
  %1568 = vmatmul.mubr.f32.gmra.mrb[0].mxu0 %v1193
  %v1569 = vpop.f32.mrb[0].mxu0
  %v1570 = vadd.f32 0.0, %v1569
  %v1571 = vpop.f32.mrb[0].mxu0
  %1572 = vmatprep.mubr.f32.mxu0 0.0
  %1573 = vmatmul.mubr.f32.gmra.mrb[0].mxu0 %v1196
  %v1574 = vpop.f32.mrb[0].mxu0
  %v1575 = vadd.f32 0.0, %v1574
  %v1576 = vpop.f32.mrb[0].mxu0
  %1577 = vmatprep.mubr.f32.mxu0 0.0
  %1578 = vmatmul.mubr.f32.gmra.mrb[0].mxu0 %v1199
  %v1579 = vpop.f32.mrb[0].mxu0
  %v1580 = vadd.f32 0.0, %v1579
  %v1581 = vpop.f32.mrb[0].mxu0
  %1582 = vmatprep.mubr.f32.mxu0 0.0
  %1583 = vmatmul.mubr.f32.gmra.mrb[0].mxu0 %v1202
  %v1584 = vpop.f32.mrb[0].mxu0
  %v1585 = vadd.f32 0.0, %v1584
  %v1586 = vpop.f32.mrb[0].mxu0
  %1587 = vmatprep.mubr.f32.mxu0 0.0
  %1588 = vmatmul.mubr.f32.gmra.mrb[0].mxu0 %v1205
  %v1589 = vpop.f32.mrb[0].mxu0
  %v1590 = vadd.f32 0.0, %v1589
  %v1591 = vpop.f32.mrb[0].mxu0
  %1592 = vdwg.mxu0
  %1656 = vrot.lane.b32.xlu0 %v1280, 64
  %v1657 = vpop.permute.xlu0 %1656
  %1658 = vrot.lane.b32.xlu0 %v1285, 64
  %v1659 = vpop.permute.xlu0 %1658
  %1660 = vrot.lane.b32.xlu0 %v1290, 64
  %v1661 = vpop.permute.xlu0 %1660
  %1662 = vrot.lane.b32.xlu0 %v1295, 64
  %v1663 = vpop.permute.xlu0 %1662
  %1664 = vrot.lane.b32.xlu0 %v1300, 64
  %v1665 = vpop.permute.xlu0 %1664
  %1666 = vrot.lane.b32.xlu0 %v1305, 64
  %v1667 = vpop.permute.xlu0 %1666
  %1668 = vrot.lane.b32.xlu0 %v1310, 64
  %v1669 = vpop.permute.xlu0 %1668
  %1670 = vrot.lane.b32.xlu0 %v1315, 64
  %v1671 = vpop.permute.xlu0 %1670
  %1672 = vrot.lane.b32.xlu0 %v1320, 64
  %v1673 = vpop.permute.xlu0 %1672
  %1674 = vrot.lane.b32.xlu0 %v1325, 64
  %v1675 = vpop.permute.xlu0 %1674
  %1676 = vrot.lane.b32.xlu0 %v1330, 64
  %v1677 = vpop.permute.xlu0 %1676
  %1678 = vrot.lane.b32.xlu0 %v1335, 64
  %v1679 = vpop.permute.xlu0 %1678
  %1680 = vrot.lane.b32.xlu0 %v1340, 64
  %v1681 = vpop.permute.xlu0 %1680
  %1682 = vrot.lane.b32.xlu0 %v1345, 64
  %v1683 = vpop.permute.xlu0 %1682
  %1684 = vrot.lane.b32.xlu0 %v1350, 64
  %v1685 = vpop.permute.xlu0 %1684
  %1686 = vrot.lane.b32.xlu0 %v1355, 64
  %v1687 = vpop.permute.xlu0 %1686
  %1688 = vrot.lane.b32.xlu0 %v1360, 64
  %v1689 = vpop.permute.xlu0 %1688
  %1690 = vrot.lane.b32.xlu0 %v1365, 64
  %v1691 = vpop.permute.xlu0 %1690
  %1692 = vrot.lane.b32.xlu0 %v1370, 64
  %v1693 = vpop.permute.xlu0 %1692
  %1694 = vrot.lane.b32.xlu0 %v1375, 64
  %v1695 = vpop.permute.xlu0 %1694
  %1696 = vrot.lane.b32.xlu0 %v1380, 64
  %v1697 = vpop.permute.xlu0 %1696
  %1698 = vrot.lane.b32.xlu0 %v1385, 64
  %v1699 = vpop.permute.xlu0 %1698
  %1700 = vrot.lane.b32.xlu0 %v1390, 64
  %v1701 = vpop.permute.xlu0 %1700
  %1702 = vrot.lane.b32.xlu0 %v1395, 64
  %v1703 = vpop.permute.xlu0 %1702
  %1704 = vrot.lane.b32.xlu0 %v1400, 64
  %v1705 = vpop.permute.xlu0 %1704
  %1706 = vrot.lane.b32.xlu0 %v1405, 64
  %v1707 = vpop.permute.xlu0 %1706
  %1708 = vrot.lane.b32.xlu0 %v1410, 64
  %v1709 = vpop.permute.xlu0 %1708
  %1710 = vrot.lane.b32.xlu0 %v1415, 64
  %v1711 = vpop.permute.xlu0 %1710
  %1712 = vrot.lane.b32.xlu0 %v1420, 64
  %v1713 = vpop.permute.xlu0 %1712
  %1714 = vrot.lane.b32.xlu0 %v1425, 64
  %v1715 = vpop.permute.xlu0 %1714
  %1716 = vrot.lane.b32.xlu0 %v1430, 64
  %v1717 = vpop.permute.xlu0 %1716
  %1718 = vrot.lane.b32.xlu0 %v1435, 64
  %v1719 = vpop.permute.xlu0 %1718
  %1720 = vrot.lane.b32.xlu0 %v1440, 64
  %v1721 = vpop.permute.xlu0 %1720
  %1722 = vrot.lane.b32.xlu0 %v1445, 64
  %v1723 = vpop.permute.xlu0 %1722
  %1724 = vrot.lane.b32.xlu0 %v1450, 64
  %v1725 = vpop.permute.xlu0 %1724
  %1726 = vrot.lane.b32.xlu0 %v1455, 64
  %v1727 = vpop.permute.xlu0 %1726
  %1728 = vrot.lane.b32.xlu0 %v1460, 64
  %v1729 = vpop.permute.xlu0 %1728
  %1730 = vrot.lane.b32.xlu0 %v1465, 64
  %v1731 = vpop.permute.xlu0 %1730
  %1732 = vrot.lane.b32.xlu0 %v1470, 64
  %v1733 = vpop.permute.xlu0 %1732
  %1734 = vrot.lane.b32.xlu0 %v1475, 64
  %v1735 = vpop.permute.xlu0 %1734
  %1736 = vrot.lane.b32.xlu0 %v1480, 64
  %v1737 = vpop.permute.xlu0 %1736
  %1738 = vrot.lane.b32.xlu0 %v1485, 64
  %v1739 = vpop.permute.xlu0 %1738
  %1740 = vrot.lane.b32.xlu0 %v1490, 64
  %v1741 = vpop.permute.xlu0 %1740
  %1742 = vrot.lane.b32.xlu0 %v1495, 64
  %v1743 = vpop.permute.xlu0 %1742
  %1744 = vrot.lane.b32.xlu0 %v1500, 64
  %v1745 = vpop.permute.xlu0 %1744
  %1746 = vrot.lane.b32.xlu0 %v1505, 64
  %v1747 = vpop.permute.xlu0 %1746
  %1748 = vrot.lane.b32.xlu0 %v1510, 64
  %v1749 = vpop.permute.xlu0 %1748
  %1750 = vrot.lane.b32.xlu0 %v1515, 64
  %v1751 = vpop.permute.xlu0 %1750
  %1752 = vrot.lane.b32.xlu0 %v1520, 64
  %v1753 = vpop.permute.xlu0 %1752
  %1754 = vrot.lane.b32.xlu0 %v1525, 64
  %v1755 = vpop.permute.xlu0 %1754
  %1756 = vrot.lane.b32.xlu0 %v1530, 64
  %v1757 = vpop.permute.xlu0 %1756
  %1758 = vrot.lane.b32.xlu0 %v1535, 64
  %v1759 = vpop.permute.xlu0 %1758
  %1760 = vrot.lane.b32.xlu0 %v1540, 64
  %v1761 = vpop.permute.xlu0 %1760
  %1762 = vrot.lane.b32.xlu0 %v1545, 64
  %v1763 = vpop.permute.xlu0 %1762
  %1764 = vrot.lane.b32.xlu0 %v1550, 64
  %v1765 = vpop.permute.xlu0 %1764
  %1766 = vrot.lane.b32.xlu0 %v1555, 64
  %v1767 = vpop.permute.xlu0 %1766
  %1768 = vrot.lane.b32.xlu0 %v1560, 64
  %v1769 = vpop.permute.xlu0 %1768
  %1770 = vrot.lane.b32.xlu0 %v1565, 64
  %v1771 = vpop.permute.xlu0 %1770
  %1772 = vrot.lane.b32.xlu0 %v1570, 64
  %v1773 = vpop.permute.xlu0 %1772
  %1774 = vrot.lane.b32.xlu0 %v1575, 64
  %v1775 = vpop.permute.xlu0 %1774
  %1776 = vrot.lane.b32.xlu0 %v1580, 64
  %v1777 = vpop.permute.xlu0 %1776
  %1778 = vrot.lane.b32.xlu0 %v1585, 64
  %v1779 = vpop.permute.xlu0 %1778
  %1780 = vrot.lane.b32.xlu0 %v1590, 64
  %v1781 = vpop.permute.xlu0 %1780
  %v1845 = vadd.f32 %v387, %v1657
  %v1846 = vadd.f32 %v392, %v1659
  %v1847 = vadd.f32 %v397, %v1661
  %v1848 = vadd.f32 %v402, %v1663
  %v1849 = vadd.f32 %v407, %v1665
  %v1850 = vadd.f32 %v412, %v1667
  %v1851 = vadd.f32 %v417, %v1669
  %v1852 = vadd.f32 %v422, %v1671
  %v1853 = vadd.f32 %v427, %v1673
  %v1854 = vadd.f32 %v432, %v1675
  %v1855 = vadd.f32 %v437, %v1677
  %v1856 = vadd.f32 %v442, %v1679
  %v1857 = vadd.f32 %v447, %v1681
  %v1858 = vadd.f32 %v452, %v1683
  %v1859 = vadd.f32 %v457, %v1685
  %v1860 = vadd.f32 %v462, %v1687
  %v1861 = vadd.f32 %v467, %v1689
  %v1862 = vadd.f32 %v472, %v1691
  %v1863 = vadd.f32 %v477, %v1693
  %v1864 = vadd.f32 %v482, %v1695
  %v1865 = vadd.f32 %v487, %v1697
  %v1866 = vadd.f32 %v492, %v1699
  %v1867 = vadd.f32 %v497, %v1701
  %v1868 = vadd.f32 %v502, %v1703
  %v1869 = vadd.f32 %v507, %v1705
  %v1870 = vadd.f32 %v512, %v1707
  %v1871 = vadd.f32 %v517, %v1709
  %v1872 = vadd.f32 %v522, %v1711
  %v1873 = vadd.f32 %v527, %v1713
  %v1874 = vadd.f32 %v532, %v1715
  %v1875 = vadd.f32 %v537, %v1717
  %v1876 = vadd.f32 %v542, %v1719
  %v1877 = vadd.f32 %v547, %v1721
  %v1878 = vadd.f32 %v552, %v1723
  %v1879 = vadd.f32 %v557, %v1725
  %v1880 = vadd.f32 %v562, %v1727
  %v1881 = vadd.f32 %v567, %v1729
  %v1882 = vadd.f32 %v572, %v1731
  %v1883 = vadd.f32 %v577, %v1733
  %v1884 = vadd.f32 %v582, %v1735
  %v1885 = vadd.f32 %v587, %v1737
  %v1886 = vadd.f32 %v592, %v1739
  %v1887 = vadd.f32 %v597, %v1741
  %v1888 = vadd.f32 %v602, %v1743
  %v1889 = vadd.f32 %v607, %v1745
  %v1890 = vadd.f32 %v612, %v1747
  %v1891 = vadd.f32 %v617, %v1749
  %v1892 = vadd.f32 %v622, %v1751
  %v1893 = vadd.f32 %v627, %v1753
  %v1894 = vadd.f32 %v632, %v1755
  %v1895 = vadd.f32 %v637, %v1757
  %v1896 = vadd.f32 %v642, %v1759
  %v1897 = vadd.f32 %v647, %v1761
  %v1898 = vadd.f32 %v652, %v1763
  %v1899 = vadd.f32 %v657, %v1765
  %v1900 = vadd.f32 %v662, %v1767
  %v1901 = vadd.f32 %v667, %v1769
  %v1902 = vadd.f32 %v672, %v1771
  %v1903 = vadd.f32 %v677, %v1773
  %v1904 = vadd.f32 %v682, %v1775
  %v1905 = vadd.f32 %v687, %v1777
  %v1906 = vadd.f32 %v692, %v1779
  %v1907 = vadd.f32 %v697, %v1781
  %v1908 = vld [vmem:[%s4] sm:$0x1]
  %v1910 = vlaneseq
  %v1911 = vshrl.u32 %v1910, 7
  %v1912 = vsub.s32 0, %v1911
  %v1913 = vrot.slane %v1908, %v1912
  %1914 = vrot.lane.b32.xlu0 %v1913, 64
  %v1915 = vpop.permute.xlu0 %1914
  %v1917 = vadd.f32 %v1845, %v1915
  %v1918 = vadd.f32 %v1846, %v1915
  %v1919 = vadd.f32 %v1847, %v1915
  %v1920 = vadd.f32 %v1848, %v1915
  %v1921 = vadd.f32 %v1849, %v1915
  %v1922 = vadd.f32 %v1850, %v1915
  %v1923 = vadd.f32 %v1851, %v1915
  %v1924 = vadd.f32 %v1852, %v1915
  %v1925 = vadd.f32 %v1853, %v1915
  %v1926 = vadd.f32 %v1854, %v1915
  %v1927 = vadd.f32 %v1855, %v1915
  %v1928 = vadd.f32 %v1856, %v1915
  %v1929 = vadd.f32 %v1857, %v1915
  %v1930 = vadd.f32 %v1858, %v1915
  %v1931 = vadd.f32 %v1859, %v1915
  %v1932 = vadd.f32 %v1860, %v1915
  %v1933 = vadd.f32 %v1861, %v1915
  %v1934 = vadd.f32 %v1862, %v1915
  %v1935 = vadd.f32 %v1863, %v1915
  %v1936 = vadd.f32 %v1864, %v1915
  %v1937 = vadd.f32 %v1865, %v1915
  %v1938 = vadd.f32 %v1866, %v1915
  %v1939 = vadd.f32 %v1867, %v1915
  %v1940 = vadd.f32 %v1868, %v1915
  %v1941 = vadd.f32 %v1869, %v1915
  %v1942 = vadd.f32 %v1870, %v1915
  %v1943 = vadd.f32 %v1871, %v1915
  %v1944 = vadd.f32 %v1872, %v1915
  %v1945 = vadd.f32 %v1873, %v1915
  %v1946 = vadd.f32 %v1874, %v1915
  %v1947 = vadd.f32 %v1875, %v1915
  %v1948 = vadd.f32 %v1876, %v1915
  %v1949 = vadd.f32 %v1877, %v1915
  %v1950 = vadd.f32 %v1878, %v1915
  %v1951 = vadd.f32 %v1879, %v1915
  %v1952 = vadd.f32 %v1880, %v1915
  %v1953 = vadd.f32 %v1881, %v1915
  %v1954 = vadd.f32 %v1882, %v1915
  %v1955 = vadd.f32 %v1883, %v1915
  %v1956 = vadd.f32 %v1884, %v1915
  %v1957 = vadd.f32 %v1885, %v1915
  %v1958 = vadd.f32 %v1886, %v1915
  %v1959 = vadd.f32 %v1887, %v1915
  %v1960 = vadd.f32 %v1888, %v1915
  %v1961 = vadd.f32 %v1889, %v1915
  %v1962 = vadd.f32 %v1890, %v1915
  %v1963 = vadd.f32 %v1891, %v1915
  %v1964 = vadd.f32 %v1892, %v1915
  %v1965 = vadd.f32 %v1893, %v1915
  %v1966 = vadd.f32 %v1894, %v1915
  %v1967 = vadd.f32 %v1895, %v1915
  %v1968 = vadd.f32 %v1896, %v1915
  %v1969 = vadd.f32 %v1897, %v1915
  %v1970 = vadd.f32 %v1898, %v1915
  %v1971 = vadd.f32 %v1899, %v1915
  %v1972 = vadd.f32 %v1900, %v1915
  %v1973 = vadd.f32 %v1901, %v1915
  %v1974 = vadd.f32 %v1902, %v1915
  %v1975 = vadd.f32 %v1903, %v1915
  %v1976 = vadd.f32 %v1904, %v1915
  %v1977 = vadd.f32 %v1905, %v1915
  %v1978 = vadd.f32 %v1906, %v1915
  %v1979 = vadd.f32 %v1907, %v1915
  %2043 = vrot.lane.b32.xlu0 %v1917, 64
  %v2044 = vpop.permute.xlu0 %2043
  %2045 = vrot.lane.b32.xlu0 %v1918, 64
  %v2046 = vpop.permute.xlu0 %2045
  %2047 = vrot.lane.b32.xlu0 %v1919, 64
  %v2048 = vpop.permute.xlu0 %2047
  %2049 = vrot.lane.b32.xlu0 %v1920, 64
  %v2050 = vpop.permute.xlu0 %2049
  %2051 = vrot.lane.b32.xlu0 %v1921, 64
  %v2052 = vpop.permute.xlu0 %2051
  %2053 = vrot.lane.b32.xlu0 %v1922, 64
  %v2054 = vpop.permute.xlu0 %2053
  %2055 = vrot.lane.b32.xlu0 %v1923, 64
  %v2056 = vpop.permute.xlu0 %2055
  %2057 = vrot.lane.b32.xlu0 %v1924, 64
  %v2058 = vpop.permute.xlu0 %2057
  %2059 = vrot.lane.b32.xlu0 %v1925, 64
  %v2060 = vpop.permute.xlu0 %2059
  %2061 = vrot.lane.b32.xlu0 %v1926, 64
  %v2062 = vpop.permute.xlu0 %2061
  %2063 = vrot.lane.b32.xlu0 %v1927, 64
  %v2064 = vpop.permute.xlu0 %2063
  %2065 = vrot.lane.b32.xlu0 %v1928, 64
  %v2066 = vpop.permute.xlu0 %2065
  %2067 = vrot.lane.b32.xlu0 %v1929, 64
  %v2068 = vpop.permute.xlu0 %2067
  %2069 = vrot.lane.b32.xlu0 %v1930, 64
  %v2070 = vpop.permute.xlu0 %2069
  %2071 = vrot.lane.b32.xlu0 %v1931, 64
  %v2072 = vpop.permute.xlu0 %2071
  %2073 = vrot.lane.b32.xlu0 %v1932, 64
  %v2074 = vpop.permute.xlu0 %2073
  %2075 = vrot.lane.b32.xlu0 %v1933, 64
  %v2076 = vpop.permute.xlu0 %2075
  %2077 = vrot.lane.b32.xlu0 %v1934, 64
  %v2078 = vpop.permute.xlu0 %2077
  %2079 = vrot.lane.b32.xlu0 %v1935, 64
  %v2080 = vpop.permute.xlu0 %2079
  %2081 = vrot.lane.b32.xlu0 %v1936, 64
  %v2082 = vpop.permute.xlu0 %2081
  %2083 = vrot.lane.b32.xlu0 %v1937, 64
  %v2084 = vpop.permute.xlu0 %2083
  %2085 = vrot.lane.b32.xlu0 %v1938, 64
  %v2086 = vpop.permute.xlu0 %2085
  %2087 = vrot.lane.b32.xlu0 %v1939, 64
  %v2088 = vpop.permute.xlu0 %2087
  %2089 = vrot.lane.b32.xlu0 %v1940, 64
  %v2090 = vpop.permute.xlu0 %2089
  %2091 = vrot.lane.b32.xlu0 %v1941, 64
  %v2092 = vpop.permute.xlu0 %2091
  %2093 = vrot.lane.b32.xlu0 %v1942, 64
  %v2094 = vpop.permute.xlu0 %2093
  %2095 = vrot.lane.b32.xlu0 %v1943, 64
  %v2096 = vpop.permute.xlu0 %2095
  %2097 = vrot.lane.b32.xlu0 %v1944, 64
  %v2098 = vpop.permute.xlu0 %2097
  %2099 = vrot.lane.b32.xlu0 %v1945, 64
  %v2100 = vpop.permute.xlu0 %2099
  %2101 = vrot.lane.b32.xlu0 %v1946, 64
  %v2102 = vpop.permute.xlu0 %2101
  %2103 = vrot.lane.b32.xlu0 %v1947, 64
  %v2104 = vpop.permute.xlu0 %2103
  %2105 = vrot.lane.b32.xlu0 %v1948, 64
  %v2106 = vpop.permute.xlu0 %2105
  %2107 = vrot.lane.b32.xlu0 %v1949, 64
  %v2108 = vpop.permute.xlu0 %2107
  %2109 = vrot.lane.b32.xlu0 %v1950, 64
  %v2110 = vpop.permute.xlu0 %2109
  %2111 = vrot.lane.b32.xlu0 %v1951, 64
  %v2112 = vpop.permute.xlu0 %2111
  %2113 = vrot.lane.b32.xlu0 %v1952, 64
  %v2114 = vpop.permute.xlu0 %2113
  %2115 = vrot.lane.b32.xlu0 %v1953, 64
  %v2116 = vpop.permute.xlu0 %2115
  %2117 = vrot.lane.b32.xlu0 %v1954, 64
  %v2118 = vpop.permute.xlu0 %2117
  %2119 = vrot.lane.b32.xlu0 %v1955, 64
  %v2120 = vpop.permute.xlu0 %2119
  %2121 = vrot.lane.b32.xlu0 %v1956, 64
  %v2122 = vpop.permute.xlu0 %2121
  %2123 = vrot.lane.b32.xlu0 %v1957, 64
  %v2124 = vpop.permute.xlu0 %2123
  %2125 = vrot.lane.b32.xlu0 %v1958, 64
  %v2126 = vpop.permute.xlu0 %2125
  %2127 = vrot.lane.b32.xlu0 %v1959, 64
  %v2128 = vpop.permute.xlu0 %2127
  %2129 = vrot.lane.b32.xlu0 %v1960, 64
  %v2130 = vpop.permute.xlu0 %2129
  %2131 = vrot.lane.b32.xlu0 %v1961, 64
  %v2132 = vpop.permute.xlu0 %2131
  %2133 = vrot.lane.b32.xlu0 %v1962, 64
  %v2134 = vpop.permute.xlu0 %2133
  %2135 = vrot.lane.b32.xlu0 %v1963, 64
  %v2136 = vpop.permute.xlu0 %2135
  %2137 = vrot.lane.b32.xlu0 %v1964, 64
  %v2138 = vpop.permute.xlu0 %2137
  %2139 = vrot.lane.b32.xlu0 %v1965, 64
  %v2140 = vpop.permute.xlu0 %2139
  %2141 = vrot.lane.b32.xlu0 %v1966, 64
  %v2142 = vpop.permute.xlu0 %2141
  %2143 = vrot.lane.b32.xlu0 %v1967, 64
  %v2144 = vpop.permute.xlu0 %2143
  %2145 = vrot.lane.b32.xlu0 %v1968, 64
  %v2146 = vpop.permute.xlu0 %2145
  %2147 = vrot.lane.b32.xlu0 %v1969, 64
  %v2148 = vpop.permute.xlu0 %2147
  %2149 = vrot.lane.b32.xlu0 %v1970, 64
  %v2150 = vpop.permute.xlu0 %2149
  %2151 = vrot.lane.b32.xlu0 %v1971, 64
  %v2152 = vpop.permute.xlu0 %2151
  %2153 = vrot.lane.b32.xlu0 %v1972, 64
  %v2154 = vpop.permute.xlu0 %2153
  %2155 = vrot.lane.b32.xlu0 %v1973, 64
  %v2156 = vpop.permute.xlu0 %2155
  %2157 = vrot.lane.b32.xlu0 %v1974, 64
  %v2158 = vpop.permute.xlu0 %2157
  %2159 = vrot.lane.b32.xlu0 %v1975, 64
  %v2160 = vpop.permute.xlu0 %2159
  %2161 = vrot.lane.b32.xlu0 %v1976, 64
  %v2162 = vpop.permute.xlu0 %2161
  %2163 = vrot.lane.b32.xlu0 %v1977, 64
  %v2164 = vpop.permute.xlu0 %2163
  %2165 = vrot.lane.b32.xlu0 %v1978, 64
  %v2166 = vpop.permute.xlu0 %2165
  %2167 = vrot.lane.b32.xlu0 %v1979, 64
  %v2168 = vpop.permute.xlu0 %2167
  %2232 = vst.msk [vmem:[%s5] sm:$0xff] %vm100, %v2044
  %2233 = vst.msk [vmem:[%s5 + $0x8] sm:$0xff] %vm100, %v2046
  %2234 = vst.msk [vmem:[%s5 + $0x10] sm:$0xff] %vm100, %v2048
  %2235 = vst.msk [vmem:[%s5 + $0x18] sm:$0xff] %vm100, %v2050
  %2236 = vst.msk [vmem:[%s5 + $0x20] sm:$0xff] %vm100, %v2052
  %2237 = vst.msk [vmem:[%s5 + $0x28] sm:$0xff] %vm100, %v2054
  %2238 = vst.msk [vmem:[%s5 + $0x30] sm:$0xff] %vm100, %v2056
  %2239 = vst.msk [vmem:[%s5 + $0x38] sm:$0xff] %vm100, %v2058
  %2240 = vst.msk [vmem:[%s5 + $0x40] sm:$0xff] %vm100, %v2060
  %2241 = vst.msk [vmem:[%s5 + $0x48] sm:$0xff] %vm100, %v2062
  %2242 = vst.msk [vmem:[%s5 + $0x50] sm:$0xff] %vm100, %v2064
  %2243 = vst.msk [vmem:[%s5 + $0x58] sm:$0xff] %vm100, %v2066
  %2244 = vst.msk [vmem:[%s5 + $0x60] sm:$0xff] %vm100, %v2068
  %2245 = vst.msk [vmem:[%s5 + $0x68] sm:$0xff] %vm100, %v2070
  %2246 = vst.msk [vmem:[%s5 + $0x70] sm:$0xff] %vm100, %v2072
  %2247 = vst.msk [vmem:[%s5 + $0x78] sm:$0xff] %vm100, %v2074
  %2248 = vst.msk [vmem:[%s5 + $0x80] sm:$0xff] %vm100, %v2076
  %2249 = vst.msk [vmem:[%s5 + $0x88] sm:$0xff] %vm100, %v2078
  %2250 = vst.msk [vmem:[%s5 + $0x90] sm:$0xff] %vm100, %v2080
  %2251 = vst.msk [vmem:[%s5 + $0x98] sm:$0xff] %vm100, %v2082
  %2252 = vst.msk [vmem:[%s5 + $0xa0] sm:$0xff] %vm100, %v2084
  %2253 = vst.msk [vmem:[%s5 + $0xa8] sm:$0xff] %vm100, %v2086
  %2254 = vst.msk [vmem:[%s5 + $0xb0] sm:$0xff] %vm100, %v2088
  %2255 = vst.msk [vmem:[%s5 + $0xb8] sm:$0xff] %vm100, %v2090
  %2256 = vst.msk [vmem:[%s5 + $0xc0] sm:$0xff] %vm100, %v2092
  %2257 = vst.msk [vmem:[%s5 + $0xc8] sm:$0xff] %vm100, %v2094
  %2258 = vst.msk [vmem:[%s5 + $0xd0] sm:$0xff] %vm100, %v2096
  %2259 = vst.msk [vmem:[%s5 + $0xd8] sm:$0xff] %vm100, %v2098
  %2260 = vst.msk [vmem:[%s5 + $0xe0] sm:$0xff] %vm100, %v2100
  %2261 = vst.msk [vmem:[%s5 + $0xe8] sm:$0xff] %vm100, %v2102
  %2262 = vst.msk [vmem:[%s5 + $0xf0] sm:$0xff] %vm100, %v2104
  %2263 = vst.msk [vmem:[%s5 + $0xf8] sm:$0xff] %vm100, %v2106
  %2264 = vst.msk [vmem:[%s5 + $0x100] sm:$0xff] %vm100, %v2108
  %2265 = vst.msk [vmem:[%s5 + $0x108] sm:$0xff] %vm100, %v2110
  %2266 = vst.msk [vmem:[%s5 + $0x110] sm:$0xff] %vm100, %v2112
  %2267 = vst.msk [vmem:[%s5 + $0x118] sm:$0xff] %vm100, %v2114
  %2268 = vst.msk [vmem:[%s5 + $0x120] sm:$0xff] %vm100, %v2116
  %2269 = vst.msk [vmem:[%s5 + $0x128] sm:$0xff] %vm100, %v2118
  %2270 = vst.msk [vmem:[%s5 + $0x130] sm:$0xff] %vm100, %v2120
  %2271 = vst.msk [vmem:[%s5 + $0x138] sm:$0xff] %vm100, %v2122
  %2272 = vst.msk [vmem:[%s5 + $0x140] sm:$0xff] %vm100, %v2124
  %2273 = vst.msk [vmem:[%s5 + $0x148] sm:$0xff] %vm100, %v2126
  %2274 = vst.msk [vmem:[%s5 + $0x150] sm:$0xff] %vm100, %v2128
  %2275 = vst.msk [vmem:[%s5 + $0x158] sm:$0xff] %vm100, %v2130
  %2276 = vst.msk [vmem:[%s5 + $0x160] sm:$0xff] %vm100, %v2132
  %2277 = vst.msk [vmem:[%s5 + $0x168] sm:$0xff] %vm100, %v2134
  %2278 = vst.msk [vmem:[%s5 + $0x170] sm:$0xff] %vm100, %v2136
  %2279 = vst.msk [vmem:[%s5 + $0x178] sm:$0xff] %vm100, %v2138
  %2280 = vst.msk [vmem:[%s5 + $0x180] sm:$0xff] %vm100, %v2140
  %2281 = vst.msk [vmem:[%s5 + $0x188] sm:$0xff] %vm100, %v2142
  %2282 = vst.msk [vmem:[%s5 + $0x190] sm:$0xff] %vm100, %v2144
  %2283 = vst.msk [vmem:[%s5 + $0x198] sm:$0xff] %vm100, %v2146
  %2284 = vst.msk [vmem:[%s5 + $0x1a0] sm:$0xff] %vm100, %v2148
  %2285 = vst.msk [vmem:[%s5 + $0x1a8] sm:$0xff] %vm100, %v2150
  %2286 = vst.msk [vmem:[%s5 + $0x1b0] sm:$0xff] %vm100, %v2152
  %2287 = vst.msk [vmem:[%s5 + $0x1b8] sm:$0xff] %vm100, %v2154
  %2288 = vst.msk [vmem:[%s5 + $0x1c0] sm:$0xff] %vm100, %v2156
  %2289 = vst.msk [vmem:[%s5 + $0x1c8] sm:$0xff] %vm100, %v2158
  %2290 = vst.msk [vmem:[%s5 + $0x1d0] sm:$0xff] %vm100, %v2160
  %2291 = vst.msk [vmem:[%s5 + $0x1d8] sm:$0xff] %vm100, %v2162
  %2292 = vst.msk [vmem:[%s5 + $0x1e0] sm:$0xff] %vm100, %v2164
  %2293 = vst.msk [vmem:[%s5 + $0x1e8] sm:$0xff] %vm100, %v2166
  %vm2294 = vcmask 76800
  %2295 = vst.msk [vmem:[%s5 + $0x1f0] sm:$0xf] %vm2294, %v2168
  // Predicated region
  $region22: #{adapter_forward.1} parent=0 // pred_check
    _
  $region23: #{adapter_forward.1} parent=0 // pred_check_branch
    %2297 = sbr.rel (0) target = $region25
  $region24: #{adapter_forward.1} parent=0 // pred_region
    _
  $region25: #{adapter_forward.1} parent=0 // pred_fallthru
    _
  // Predicated region
  $region26: #{adapter_forward.1} parent=0 // pred_check
    _
  $region27: #{adapter_forward.1} parent=0 // pred_check_branch
    %2299 = sbr.rel (0) target = $region29
  $region28: #{adapter_forward.1} parent=0 // pred_region
    _
  $region29: #{adapter_forward.1} parent=0 // pred_fallthru
    _

</llo_original>
